<compile_context>
chip_gen: v7x
topology: tpu7x:2x2x1
jax: 0.10.0
libtpu: 0.0.40
codegen_flags: <defaults>
</compile_context>

<pallas_src>
import functools
import math

import jax
import jax.numpy as jnp
from jax.experimental import pallas as pl
from jax.experimental.pallas import tpu as pltpu

LANE = 128                       # feature dims padded to multiples of this
MAX_TILE = 2048                  # max rows per grid step (tunable)
ROW_ALIGN = 128                  # batch tiles are multiples of this
OUT_STORE_DTYPE = jnp.bfloat16   # bf16 store halves writeback; use float32 for full precision


def _cdiv(a, b):
    return -(-a // b)


def _round_up(n, m):
    return _cdiv(n, m) * m


def _pick_tiling(batch):
    """Choose (batch_tile, padded_batch) for a given batch size."""
    padded = _round_up(batch, ROW_ALIGN)
    n_steps = _cdiv(padded, MAX_TILE)
    if padded >= 2 * ROW_ALIGN:
        # >=2 grid steps so v7x's 2 TensorCores both get work via the
        # "parallel" batch axis; harmless (same total rows) on v5e/v6e.
        n_steps = max(n_steps, 2)
    tile = _round_up(_cdiv(padded, n_steps), ROW_ALIGN)
    return tile, tile * _cdiv(padded, tile)


def qnetwork_fc_kernel(
    x_ref,
    w1_ref, b1_ref, w2_ref, b2_ref, w3_ref, b3_ref,
    w4_ref, b4_ref, w5_ref, b5_ref, w6_ref, b6_ref,
    o_ref,
):
    # x arrives with its true 37 feature columns (no lane padding) in f32;
    # cast once to bf16 for the MXU.  fc1's weight keeps a 37-row contraction
    # dim, so no pad-lane masking is needed anywhere.
    x = x_ref[...].astype(jnp.bfloat16)

    def lin(h, w_ref, b_ref):
        # bf16 x bf16 MXU matmul with f32 accumulation, f32 bias add.
        return jnp.dot(h, w_ref[...], preferred_element_type=jnp.float32) + b_ref[...]

    # fc1.  The residual x1 is kept in bf16 so the tensor that stays live
    # across fc2..fc5 is half-sized; relu(round_bf16(v)) == round_bf16(relu(v)),
    # so the hidden path through fc2 is unchanged.
    x1 = lin(x, w1_ref, b1_ref).astype(jnp.bfloat16)
    h = jnp.maximum(x1, 0)

    # fc2..fc5 with ReLU: f32 epilogue, re-cast to bf16 only as the next MXU input.
    h = jnp.maximum(lin(h, w2_ref, b2_ref), 0.0).astype(jnp.bfloat16)
    h = jnp.maximum(lin(h, w3_ref, b3_ref), 0.0).astype(jnp.bfloat16)
    h = jnp.maximum(lin(h, w4_ref, b4_ref), 0.0).astype(jnp.bfloat16)
    h = jnp.maximum(lin(h, w5_ref, b5_ref), 0.0)           # keep f32 for the residual add

    # fc6 applied to relu(fc5(...)) + x1 (the pre-ReLU fc1 output), no ReLU.
    skip = (h + x1.astype(jnp.float32)).astype(jnp.bfloat16)
    o_ref[...] = lin(skip, w6_ref, b6_ref).astype(o_ref.dtype)


def prepare_params(params):
    """Pad each Linear's dims to lane (128) multiples and cast weights to bf16.

    The first layer's input dim is left at its true size (it must match the
    unpadded activation block); all other dims are zero-padded, so padded
    rows/columns contribute exactly nothing and the result restricted to the
    real output columns is identical math.  Returns (w1, b1, ..., w6, b6);
    weights are bf16 (in, out), biases stay f32 as (1, out).
    """
    flat = []
    for idx, (w, b) in enumerate(params):
        d_in, d_out = w.shape
        p_in = d_in if idx == 0 else _round_up(d_in, LANE)
        p_out = _round_up(d_out, LANE)
        w_p = jnp.zeros((p_in, p_out), jnp.float32).at[:d_in, :d_out].set(w)
        b_p = jnp.zeros((1, p_out), jnp.float32).at[:, :d_out].set(b.reshape(1, -1))
        flat.append(w_p.astype(jnp.bfloat16))
        flat.append(b_p)
    return tuple(flat)


@functools.partial(jax.jit, static_argnames=("out_channels",))
def qnetwork_fc_forward(x, flat_params, out_channels=4):
    batch, d_in = x.shape
    d_out_pad = flat_params[-1].shape[1]

    tile, batch_pad = _pick_tiling(batch)
    grid = (batch_pad // tile,)

    # Only the batch dim is zero-padded, and only when not already
    # tile-aligned; the 37 feature columns pass through untouched.
    x_in = x if batch_pad == batch else jnp.pad(x, ((0, batch_pad - batch), (0, 0)))

    # Weights/biases use constant-index BlockSpecs -> fetched once and held
    # resident in VMEM for the whole grid; only activation tiles stream.
    def const_spec(arr):
        return pl.BlockSpec(arr.shape, lambda i: (0, 0))

    in_specs = [pl.BlockSpec((tile, d_in), lambda i: (i, 0))]
    in_specs += [const_spec(a) for a in flat_params]
    out_spec = pl.BlockSpec((tile, d_out_pad), lambda i: (i, 0))

    weights = flat_params[0::2]
    flops = 2 * batch_pad * sum(w.shape[0] * w.shape[1] for w in weights)
    bytes_accessed = (
        x_in.size * x_in.dtype.itemsize
        + sum(a.size * a.dtype.itemsize for a in flat_params)
        + batch_pad * d_out_pad * jnp.dtype(OUT_STORE_DTYPE).itemsize)
    cost = pl.CostEstimate(flops=flops, transcendentals=0,
                           bytes_accessed=bytes_accessed)

    out = pl.pallas_call(
        qnetwork_fc_kernel,
        out_shape=jax.ShapeDtypeStruct((batch_pad, d_out_pad), OUT_STORE_DTYPE),
        grid=grid,
        in_specs=in_specs,
        out_specs=out_spec,
        compiler_params=pltpu.CompilerParams(
            dimension_semantics=("parallel",)),   # batch axis -> both TCs on v7x
        cost_estimate=cost,
    )(x_in, *flat_params)

    # Narrow slice back to the module's (batch, out_channels) Q-values.  In a
    # real pipeline this stays fused with the consumer (e.g. argmax) instead
    # of materializing a separate padded copy.
    return out[:batch, :out_channels].astype(jnp.float32)


def init_linear(key, in_features, out_features):
    """Deterministic init mimicking torch.nn.Linear defaults.

    Weight stored as (in_features, out_features) = PyTorch weight transposed,
    so each layer is a plain `x @ W + b`.
    """
    kw, kb = jax.random.split(key)
    bound = 1.0 / math.sqrt(in_features)
    w = jax.random.uniform(
        kw, (in_features, out_features), jnp.float32, minval=-bound, maxval=bound)
    b = jax.random.uniform(
        kb, (1, out_features), jnp.float32, minval=-bound, maxval=bound)
    return w, b


def init_qnetwork_fc(key, in_channels=37, out_channels=4,
                     fc1=64, fc2=128, fc3=256):
    dims = [
        (in_channels, fc1),   # fc1
        (fc1, fc2),           # fc2
        (fc2, fc3),           # fc3
        (fc3, fc2),           # fc4
        (fc2, fc1),           # fc5
        (fc1, out_channels),  # fc6
    ]
    keys = jax.random.split(key, len(dims))
    return [init_linear(k, i, o) for k, (i, o) in zip(keys, dims)]


def reference_forward(x, params):
    """Plain-JAX reference mirroring the kernel's numerics (bf16 MXU inputs,
    f32 accumulation, bf16 residual) so the correctness check is tight; the
    kernel additionally rounds the final store to bf16."""
    def lin(h, w, b):
        return jnp.dot(h.astype(jnp.bfloat16), w.astype(jnp.bfloat16),
                       preferred_element_type=jnp.float32) + b.reshape(1, -1)

    (w1, b1), (w2, b2), (w3, b3), (w4, b4), (w5, b5), (w6, b6) = params
    x1 = lin(x, w1, b1).astype(jnp.bfloat16)
    h = jax.nn.relu(x1.astype(jnp.float32))
    h = jax.nn.relu(lin(h, w2, b2))
    h = jax.nn.relu(lin(h, w3, b3))
    h = jax.nn.relu(lin(h, w4, b4))
    h = jax.nn.relu(lin(h, w5, b5))
    return lin(h + x1.astype(jnp.float32), w6, b6)


if __name__ == "__main__":
    key = jax.random.PRNGKey(0)
    k_param, k_x = jax.random.split(key)

    in_channels, out_channels = 37, 4
    # Small batch that is not tile-aligned: exercises the row-pad path, a
    # 2-step grid (two 128-row tiles) and the final output slice.
    batch = 150

    params = init_qnetwork_fc(k_param, in_channels=in_channels,
                              out_channels=out_channels)
    flat_params = prepare_params(params)   # padded + bf16-cast once, at init

    x = jax.random.normal(k_x, (batch, in_channels), jnp.float32)

    out = qnetwork_fc_forward(x, flat_params, out_channels=out_channels)
    out = jax.block_until_ready(out)

    ref = reference_forward(x, params)
    assert out.shape == (batch, out_channels), out.shape
    max_err = float(jnp.max(jnp.abs(out - ref)))
    assert jnp.allclose(out, ref, atol=1e-2, rtol=1e-2), max_err

    print("KERNEL_OK")
</pallas_src>

<mosaic_0001>
module attributes {stable_mosaic.version = 11 : i64} {
  func.func @qnetwork_fc_kernel(%arg0: i32, %arg1: memref<128x37xf32, #tpu.memory_space<vmem>>, %arg2: memref<37x128xbf16, #tpu.memory_space<vmem>>, %arg3: memref<1x128xf32, #tpu.memory_space<vmem>>, %arg4: memref<128x128xbf16, #tpu.memory_space<vmem>>, %arg5: memref<1x128xf32, #tpu.memory_space<vmem>>, %arg6: memref<128x256xbf16, #tpu.memory_space<vmem>>, %arg7: memref<1x256xf32, #tpu.memory_space<vmem>>, %arg8: memref<256x128xbf16, #tpu.memory_space<vmem>>, %arg9: memref<1x128xf32, #tpu.memory_space<vmem>>, %arg10: memref<128x128xbf16, #tpu.memory_space<vmem>>, %arg11: memref<1x128xf32, #tpu.memory_space<vmem>>, %arg12: memref<128x128xbf16, #tpu.memory_space<vmem>>, %arg13: memref<1x128xf32, #tpu.memory_space<vmem>>, %arg14: memref<128x128xbf16, #tpu.memory_space<vmem>>) attributes {dimension_semantics = [#tpu.dimension_semantics<parallel>], iteration_bounds = array<i64: 2>, scalar_prefetch = 0 : i64, scratch_operands = 0 : i64, tpu.core_type = #tpu.core_type<tc>, window_params = [{transform_indices = @transform_0, window_bounds = array<i64: 128, 37>}, {pipeline_mode = #tpu.pipeline_mode<synchronous>, transform_indices = @transform_1, window_bounds = array<i64: 37, 128>}, {pipeline_mode = #tpu.pipeline_mode<synchronous>, transform_indices = @transform_2, window_bounds = array<i64: 1, 128>}, {pipeline_mode = #tpu.pipeline_mode<synchronous>, transform_indices = @transform_3, window_bounds = array<i64: 128, 128>}, {pipeline_mode = #tpu.pipeline_mode<synchronous>, transform_indices = @transform_4, window_bounds = array<i64: 1, 128>}, {pipeline_mode = #tpu.pipeline_mode<synchronous>, transform_indices = @transform_5, window_bounds = array<i64: 128, 256>}, {pipeline_mode = #tpu.pipeline_mode<synchronous>, transform_indices = @transform_6, window_bounds = array<i64: 1, 256>}, {pipeline_mode = #tpu.pipeline_mode<synchronous>, transform_indices = @transform_7, window_bounds = array<i64: 256, 128>}, {pipeline_mode = #tpu.pipeline_mode<synchronous>, transform_indices = @transform_8, window_bounds = array<i64: 1, 128>}, {pipeline_mode = #tpu.pipeline_mode<synchronous>, transform_indices = @transform_9, window_bounds = array<i64: 128, 128>}, {pipeline_mode = #tpu.pipeline_mode<synchronous>, transform_indices = @transform_10, window_bounds = array<i64: 1, 128>}, {pipeline_mode = #tpu.pipeline_mode<synchronous>, transform_indices = @transform_11, window_bounds = array<i64: 128, 128>}, {pipeline_mode = #tpu.pipeline_mode<synchronous>, transform_indices = @transform_12, window_bounds = array<i64: 1, 128>}, {transform_indices = @transform_13, window_bounds = array<i64: 128, 128>}]} {
    %c0 = arith.constant 0 : index
    %c0_0 = arith.constant 0 : index
    %0 = vector.load %arg1[%c0, %c0_0] : memref<128x37xf32, #tpu.memory_space<vmem>>, vector<128x37xf32>
    %1 = arith.truncf %0 : vector<128x37xf32> to vector<128x37xbf16>
    %c0_1 = arith.constant 0 : index
    %c0_2 = arith.constant 0 : index
    %2 = vector.load %arg2[%c0_1, %c0_2] : memref<37x128xbf16, #tpu.memory_space<vmem>>, vector<37x128xbf16>
    %cst = arith.constant dense<0.000000e+00> : vector<128x128xf32>
    %3 = tpu.matmul %1, %2, %cst {dimension_numbers = #tpu.dot_dimension_numbers<[1], [0], [0], [1], [0, 0, 1, 1], [], []>} : vector<128x37xbf16>, vector<37x128xbf16>, vector<128x128xf32> -> vector<128x128xf32>
    %c0_3 = arith.constant 0 : index
    %c0_4 = arith.constant 0 : index
    %4 = vector.load %arg3[%c0_3, %c0_4] : memref<1x128xf32, #tpu.memory_space<vmem>>, vector<1x128xf32>
    %5 = vector.broadcast %4 : vector<1x128xf32> to vector<128x128xf32>
    %6 = arith.addf %3, %5 : vector<128x128xf32>
    %7 = arith.truncf %6 : vector<128x128xf32> to vector<128x128xbf16>
    %cst_5 = arith.constant 0.000000e+00 : bf16
    %8 = vector.broadcast %cst_5 : bf16 to vector<128x128xbf16>
    %9 = arith.maximumf %7, %8 : vector<128x128xbf16>
    %c0_6 = arith.constant 0 : index
    %c0_7 = arith.constant 0 : index
    %10 = vector.load %arg4[%c0_6, %c0_7] : memref<128x128xbf16, #tpu.memory_space<vmem>>, vector<128x128xbf16>
    %cst_8 = arith.constant dense<0.000000e+00> : vector<128x128xf32>
    %11 = tpu.matmul %9, %10, %cst_8 {dimension_numbers = #tpu.dot_dimension_numbers<[1], [0], [0], [1], [0, 0, 1, 1], [], []>} : vector<128x128xbf16>, vector<128x128xbf16>, vector<128x128xf32> -> vector<128x128xf32>
    %c0_9 = arith.constant 0 : index
    %c0_10 = arith.constant 0 : index
    %12 = vector.load %arg5[%c0_9, %c0_10] : memref<1x128xf32, #tpu.memory_space<vmem>>, vector<1x128xf32>
    %13 = vector.broadcast %12 : vector<1x128xf32> to vector<128x128xf32>
    %14 = arith.addf %11, %13 : vector<128x128xf32>
    %cst_11 = arith.constant 0.000000e+00 : f32
    %15 = vector.broadcast %cst_11 : f32 to vector<128x128xf32>
    %16 = arith.maximumf %14, %15 : vector<128x128xf32>
    %17 = arith.truncf %16 : vector<128x128xf32> to vector<128x128xbf16>
    %c0_12 = arith.constant 0 : index
    %c0_13 = arith.constant 0 : index
    %18 = vector.load %arg6[%c0_12, %c0_13] : memref<128x256xbf16, #tpu.memory_space<vmem>>, vector<128x256xbf16>
    %cst_14 = arith.constant dense<0.000000e+00> : vector<128x256xf32>
    %19 = tpu.matmul %17, %18, %cst_14 {dimension_numbers = #tpu.dot_dimension_numbers<[1], [0], [0], [1], [0, 0, 1, 1], [], []>} : vector<128x128xbf16>, vector<128x256xbf16>, vector<128x256xf32> -> vector<128x256xf32>
    %c0_15 = arith.constant 0 : index
    %c0_16 = arith.constant 0 : index
    %20 = vector.load %arg7[%c0_15, %c0_16] : memref<1x256xf32, #tpu.memory_space<vmem>>, vector<1x256xf32>
    %21 = vector.broadcast %20 : vector<1x256xf32> to vector<128x256xf32>
    %22 = arith.addf %19, %21 : vector<128x256xf32>
    %cst_17 = arith.constant 0.000000e+00 : f32
    %23 = vector.broadcast %cst_17 : f32 to vector<128x256xf32>
    %24 = arith.maximumf %22, %23 : vector<128x256xf32>
    %25 = arith.truncf %24 : vector<128x256xf32> to vector<128x256xbf16>
    %c0_18 = arith.constant 0 : index
    %c0_19 = arith.constant 0 : index
    %26 = vector.load %arg8[%c0_18, %c0_19] : memref<256x128xbf16, #tpu.memory_space<vmem>>, vector<256x128xbf16>
    %cst_20 = arith.constant dense<0.000000e+00> : vector<128x128xf32>
    %27 = tpu.matmul %25, %26, %cst_20 {dimension_numbers = #tpu.dot_dimension_numbers<[1], [0], [0], [1], [0, 0, 1, 1], [], []>} : vector<128x256xbf16>, vector<256x128xbf16>, vector<128x128xf32> -> vector<128x128xf32>
    %c0_21 = arith.constant 0 : index
    %c0_22 = arith.constant 0 : index
    %28 = vector.load %arg9[%c0_21, %c0_22] : memref<1x128xf32, #tpu.memory_space<vmem>>, vector<1x128xf32>
    %29 = vector.broadcast %28 : vector<1x128xf32> to vector<128x128xf32>
    %30 = arith.addf %27, %29 : vector<128x128xf32>
    %cst_23 = arith.constant 0.000000e+00 : f32
    %31 = vector.broadcast %cst_23 : f32 to vector<128x128xf32>
    %32 = arith.maximumf %30, %31 : vector<128x128xf32>
    %33 = arith.truncf %32 : vector<128x128xf32> to vector<128x128xbf16>
    %c0_24 = arith.constant 0 : index
    %c0_25 = arith.constant 0 : index
    %34 = vector.load %arg10[%c0_24, %c0_25] : memref<128x128xbf16, #tpu.memory_space<vmem>>, vector<128x128xbf16>
    %cst_26 = arith.constant dense<0.000000e+00> : vector<128x128xf32>
    %35 = tpu.matmul %33, %34, %cst_26 {dimension_numbers = #tpu.dot_dimension_numbers<[1], [0], [0], [1], [0, 0, 1, 1], [], []>} : vector<128x128xbf16>, vector<128x128xbf16>, vector<128x128xf32> -> vector<128x128xf32>
    %c0_27 = arith.constant 0 : index
    %c0_28 = arith.constant 0 : index
    %36 = vector.load %arg11[%c0_27, %c0_28] : memref<1x128xf32, #tpu.memory_space<vmem>>, vector<1x128xf32>
    %37 = vector.broadcast %36 : vector<1x128xf32> to vector<128x128xf32>
    %38 = arith.addf %35, %37 : vector<128x128xf32>
    %cst_29 = arith.constant 0.000000e+00 : f32
    %39 = vector.broadcast %cst_29 : f32 to vector<128x128xf32>
    %40 = arith.maximumf %38, %39 : vector<128x128xf32>
    %41 = arith.extf %7 : vector<128x128xbf16> to vector<128x128xf32>
    %42 = arith.addf %40, %41 : vector<128x128xf32>
    %43 = arith.truncf %42 : vector<128x128xf32> to vector<128x128xbf16>
    %c0_30 = arith.constant 0 : index
    %c0_31 = arith.constant 0 : index
    %44 = vector.load %arg12[%c0_30, %c0_31] : memref<128x128xbf16, #tpu.memory_space<vmem>>, vector<128x128xbf16>
    %cst_32 = arith.constant dense<0.000000e+00> : vector<128x128xf32>
    %45 = tpu.matmul %43, %44, %cst_32 {dimension_numbers = #tpu.dot_dimension_numbers<[1], [0], [0], [1], [0, 0, 1, 1], [], []>} : vector<128x128xbf16>, vector<128x128xbf16>, vector<128x128xf32> -> vector<128x128xf32>
    %c0_33 = arith.constant 0 : index
    %c0_34 = arith.constant 0 : index
    %46 = vector.load %arg13[%c0_33, %c0_34] : memref<1x128xf32, #tpu.memory_space<vmem>>, vector<1x128xf32>
    %47 = vector.broadcast %46 : vector<1x128xf32> to vector<128x128xf32>
    %48 = arith.addf %45, %47 : vector<128x128xf32>
    %49 = arith.truncf %48 : vector<128x128xf32> to vector<128x128xbf16>
    %c0_35 = arith.constant 0 : index
    %c0_36 = arith.constant 0 : index
    %50 = vector.load %arg14[%c0_35, %c0_36] : memref<128x128xbf16, #tpu.memory_space<vmem>>, vector<128x128xbf16>
    tpu.vector_store %arg14[%c0_35, %c0_36], %49 {strides = array<i32>} : memref<128x128xbf16, #tpu.memory_space<vmem>>, vector<128x128xbf16>,
    return
  }
  func.func @transform_0(%arg0: i32) -> (i32, i32) {
    %c0_i32 = arith.constant 0 : i32
    %c0_i32_0 = arith.constant 0 : i32
    return %arg0, %c0_i32 : i32, i32
  }
  func.func @transform_1(%arg0: i32) -> (i32, i32) {
    %c0_i32 = arith.constant 0 : i32
    %c0_i32_0 = arith.constant 0 : i32
    %c0_i32_1 = arith.constant 0 : i32
    return %c0_i32, %c0_i32_0 : i32, i32
  }
  func.func @transform_2(%arg0: i32) -> (i32, i32) {
    %c0_i32 = arith.constant 0 : i32
    %c0_i32_0 = arith.constant 0 : i32
    %c0_i32_1 = arith.constant 0 : i32
    return %c0_i32, %c0_i32_0 : i32, i32
  }
  func.func @transform_3(%arg0: i32) -> (i32, i32) {
    %c0_i32 = arith.constant 0 : i32
    %c0_i32_0 = arith.constant 0 : i32
    %c0_i32_1 = arith.constant 0 : i32
    return %c0_i32, %c0_i32_0 : i32, i32
  }
  func.func @transform_4(%arg0: i32) -> (i32, i32) {
    %c0_i32 = arith.constant 0 : i32
    %c0_i32_0 = arith.constant 0 : i32
    %c0_i32_1 = arith.constant 0 : i32
    return %c0_i32, %c0_i32_0 : i32, i32
  }
  func.func @transform_5(%arg0: i32) -> (i32, i32) {
    %c0_i32 = arith.constant 0 : i32
    %c0_i32_0 = arith.constant 0 : i32
    %c0_i32_1 = arith.constant 0 : i32
    return %c0_i32, %c0_i32_0 : i32, i32
  }
  func.func @transform_6(%arg0: i32) -> (i32, i32) {
    %c0_i32 = arith.constant 0 : i32
    %c0_i32_0 = arith.constant 0 : i32
    %c0_i32_1 = arith.constant 0 : i32
    return %c0_i32, %c0_i32_0 : i32, i32
  }
  func.func @transform_7(%arg0: i32) -> (i32, i32) {
    %c0_i32 = arith.constant 0 : i32
    %c0_i32_0 = arith.constant 0 : i32
    %c0_i32_1 = arith.constant 0 : i32
    return %c0_i32, %c0_i32_0 : i32, i32
  }
  func.func @transform_8(%arg0: i32) -> (i32, i32) {
    %c0_i32 = arith.constant 0 : i32
    %c0_i32_0 = arith.constant 0 : i32
    %c0_i32_1 = arith.constant 0 : i32
    return %c0_i32, %c0_i32_0 : i32, i32
  }
  func.func @transform_9(%arg0: i32) -> (i32, i32) {
    %c0_i32 = arith.constant 0 : i32
    %c0_i32_0 = arith.constant 0 : i32
    %c0_i32_1 = arith.constant 0 : i32
    return %c0_i32, %c0_i32_0 : i32, i32
  }
  func.func @transform_10(%arg0: i32) -> (i32, i32) {
    %c0_i32 = arith.constant 0 : i32
    %c0_i32_0 = arith.constant 0 : i32
    %c0_i32_1 = arith.constant 0 : i32
    return %c0_i32, %c0_i32_0 : i32, i32
  }
  func.func @transform_11(%arg0: i32) -> (i32, i32) {
    %c0_i32 = arith.constant 0 : i32
    %c0_i32_0 = arith.constant 0 : i32
    %c0_i32_1 = arith.constant 0 : i32
    return %c0_i32, %c0_i32_0 : i32, i32
  }
  func.func @transform_12(%arg0: i32) -> (i32, i32) {
    %c0_i32 = arith.constant 0 : i32
    %c0_i32_0 = arith.constant 0 : i32
    %c0_i32_1 = arith.constant 0 : i32
    return %c0_i32, %c0_i32_0 : i32, i32
  }
  func.func @transform_13(%arg0: i32) -> (i32, i32) {
    %c0_i32 = arith.constant 0 : i32
    %c0_i32_0 = arith.constant 0 : i32
    return %arg0, %c0_i32 : i32, i32
  }
}

</mosaic_0001>

<llo_original>
// kernel: qnetwork_fc_forward.1
$region0: #{qnetwork_fc_forward.1}
  #allocation0 [shape = 'u32[]', space=smem, size = 0x4, offset = 0x4, fixed_abs, tag = 'smem constant byte address 0x4 - core index']
  #allocation1 [shape = 'u32[144,128]{1,0:T(1,128)}', space=vmem, size = 0x12000, scoped, tag = 'internal scratch']
  %s0 = inlined_call_operand.vmem [shape: f32[256,37], index: 0, kind: input, shape index: {}]
  %s1 = inlined_call_operand.vmem [shape: bf16[37,128], index: 1, kind: input, shape index: {}]
  %s2 = inlined_call_operand.vmem [shape: f32[1,128], index: 2, kind: input, shape index: {}]
  %s3 = inlined_call_operand.vmem [shape: bf16[128,128], index: 3, kind: input, shape index: {}]
  %s4 = inlined_call_operand.vmem [shape: f32[1,128], index: 4, kind: input, shape index: {}]
  %s5 = inlined_call_operand.vmem [shape: bf16[128,256], index: 5, kind: input, shape index: {}]
  %s6 = inlined_call_operand.vmem [shape: f32[1,256], index: 6, kind: input, shape index: {}]
  %s7 = inlined_call_operand.vmem [shape: bf16[256,128], index: 7, kind: input, shape index: {}]
  %s8 = inlined_call_operand.vmem [shape: f32[1,128], index: 8, kind: input, shape index: {}]
  %s9 = inlined_call_operand.vmem [shape: bf16[128,128], index: 9, kind: input, shape index: {}]
  %s10 = inlined_call_operand.vmem [shape: f32[1,128], index: 10, kind: input, shape index: {}]
  %s11 = inlined_call_operand.vmem [shape: bf16[128,128], index: 11, kind: input, shape index: {}]
  %s12 = inlined_call_operand.vmem [shape: f32[1,128], index: 12, kind: input, shape index: {}]
  %s13 = inlined_call_operand.vmem [shape: bf16[256,128], index: 13, kind: output, shape index: {}]
  %s14 = sld [smem:[#allocation0]]
  $region85: #{qnetwork_fc_forward.1} parent=0
    _
  %s16 = ssub.s32 1, %s14
  %s17 = scalar_select 0, %s16, %s14
  loop: start=0, step=1, limit=4
  $region2: #{qnetwork_fc_forward.1} parent=0 // loop_pre_header
    _
  $region3: #{qnetwork_fc_forward.1} parent=0 // loop_header
    %s19 = sphi 0, %s23
    %p20 = scmp.ge.s32.totalorder %s19, 4
    %s29 = sphi 0, %s31
    %s32 = sphi 0, %s29
    %s33 = sphi 0, %s32
    %s49 = sphi 0, %s33
    %s53 = sphi 0, %s53
    %s55 = sphi 0, %s53
    %s56 = sphi 0, %s55
    %s70 = sphi 0, %s56
    %s74 = sphi 0, %s74
    %s76 = sphi 0, %s74
    %s77 = sphi 0, %s76
    %s91 = sphi 0, %s77
    %s95 = sphi 0, %s95
    %s97 = sphi 0, %s95
    %s98 = sphi 0, %s97
    %s112 = sphi 0, %s98
    %s116 = sphi 0, %s116
    %s118 = sphi 0, %s116
    %s119 = sphi 0, %s118
    %s133 = sphi 0, %s119
    %s137 = sphi 0, %s137
    %s139 = sphi 0, %s137
    %s140 = sphi 0, %s139
    %s154 = sphi 0, %s140
    %s158 = sphi 0, %s158
    %s160 = sphi 0, %s158
    %s161 = sphi 0, %s160
    %s175 = sphi 0, %s161
    %s179 = sphi 0, %s179
    %s181 = sphi 0, %s179
    %s182 = sphi 0, %s181
    %s196 = sphi 0, %s182
    %s200 = sphi 0, %s200
    %s202 = sphi 0, %s200
    %s203 = sphi 0, %s202
    %s217 = sphi 0, %s203
    %s221 = sphi 0, %s221
    %s223 = sphi 0, %s221
    %s224 = sphi 0, %s223
    %s238 = sphi 0, %s224
    %s242 = sphi 0, %s242
    %s244 = sphi 0, %s242
    %s245 = sphi 0, %s244
    %s259 = sphi 0, %s245
    %s263 = sphi 0, %s263
    %s265 = sphi 0, %s263
    %s266 = sphi 0, %s265
    %s280 = sphi 0, %s266
    %s284 = sphi 0, %s284
    %s286 = sphi 0, %s284
    %s287 = sphi 0, %s286
    %s301 = sphi 0, %s287
    %s307 = sphi 0, %s309
    %s310 = sphi 0, %s307
    %s311 = sphi 0, %s310
    %s327 = sphi 0, %s311
  $region4: #{qnetwork_fc_forward.1} parent=0 // loop_header_branch
    %22 = sbr.rel (%p20) target = $region8
  $region5: #{qnetwork_fc_forward.1} parent=0 // loop_body
    %s24 = ssub.s32 %s19, 1
    %s25 = ssub.s32 %s19, 2
    %s26 = sadd.s32 %s19, 1
    %s27 = ssub.s32 %s19, %s26
    %p28 = scmp.eq.s32.totalorder %s27, 0
    %s30 = sadd.s32 %s29, 1
    %s31 = scalar_select %p28, %s29, %s30
    %p34 = pneg %p28
    %p35 = scmp.eq.s32.totalorder %s19, 1
    %p36 = por %p34, %p35
    %p37 = scmp.ne.s32.totalorder %s29, %s32
    %p38 = scmp.eq.s32.totalorder %s19, 0
    %p39 = por %p37, %p38
    %p40 = scmp.ne.s32.totalorder %s29, %s32
    %p41 = scmp.eq.s32.totalorder %s24, 1
    %p42 = por %p40, %p41
    %p43 = scmp.ne.s32.totalorder %s32, %s33
    %p44 = scmp.eq.s32.totalorder %s24, 0
    %p45 = por %p43, %p44
    %p46 = scmp.ne.s32.totalorder %s32, %s33
    %p47 = scmp.eq.s32.totalorder %s25, 1
    %p48 = por %p46, %p47
    %p50 = scmp.ne.s32.totalorder %s33, %s49
    %p51 = scmp.eq.s32.totalorder %s25, 0
    %p52 = por %p50, %p51
    %s54 = sadd.s32 %s53, 1
    %p57 = scmp.eq.s32.totalorder %s19, 1
    %p58 = scmp.ne.s32.totalorder %s53, %s55
    %p59 = scmp.eq.s32.totalorder %s19, 0
    %p60 = por %p58, %p59
    %p61 = scmp.ne.s32.totalorder %s53, %s55
    %p62 = scmp.eq.s32.totalorder %s24, 1
    %p63 = por %p61, %p62
    %p64 = scmp.ne.s32.totalorder %s55, %s56
    %p65 = scmp.eq.s32.totalorder %s24, 0
    %p66 = por %p64, %p65
    %p67 = scmp.ne.s32.totalorder %s55, %s56
    %p68 = scmp.eq.s32.totalorder %s25, 1
    %p69 = por %p67, %p68
    %p71 = scmp.ne.s32.totalorder %s56, %s70
    %p72 = scmp.eq.s32.totalorder %s25, 0
    %p73 = por %p71, %p72
    %s75 = sadd.s32 %s74, 1
    %p78 = scmp.eq.s32.totalorder %s19, 1
    %p79 = scmp.ne.s32.totalorder %s74, %s76
    %p80 = scmp.eq.s32.totalorder %s19, 0
    %p81 = por %p79, %p80
    %p82 = scmp.ne.s32.totalorder %s74, %s76
    %p83 = scmp.eq.s32.totalorder %s24, 1
    %p84 = por %p82, %p83
    %p85 = scmp.ne.s32.totalorder %s76, %s77
    %p86 = scmp.eq.s32.totalorder %s24, 0
    %p87 = por %p85, %p86
    %p88 = scmp.ne.s32.totalorder %s76, %s77
    %p89 = scmp.eq.s32.totalorder %s25, 1
    %p90 = por %p88, %p89
    %p92 = scmp.ne.s32.totalorder %s77, %s91
    %p93 = scmp.eq.s32.totalorder %s25, 0
    %p94 = por %p92, %p93
    %s96 = sadd.s32 %s95, 1
    %p99 = scmp.eq.s32.totalorder %s19, 1
    %p100 = scmp.ne.s32.totalorder %s95, %s97
    %p101 = scmp.eq.s32.totalorder %s19, 0
    %p102 = por %p100, %p101
    %p103 = scmp.ne.s32.totalorder %s95, %s97
    %p104 = scmp.eq.s32.totalorder %s24, 1
    %p105 = por %p103, %p104
    %p106 = scmp.ne.s32.totalorder %s97, %s98
    %p107 = scmp.eq.s32.totalorder %s24, 0
    %p108 = por %p106, %p107
    %p109 = scmp.ne.s32.totalorder %s97, %s98
    %p110 = scmp.eq.s32.totalorder %s25, 1
    %p111 = por %p109, %p110
    %p113 = scmp.ne.s32.totalorder %s98, %s112
    %p114 = scmp.eq.s32.totalorder %s25, 0
    %p115 = por %p113, %p114
    %s117 = sadd.s32 %s116, 1
    %p120 = scmp.eq.s32.totalorder %s19, 1
    %p121 = scmp.ne.s32.totalorder %s116, %s118
    %p122 = scmp.eq.s32.totalorder %s19, 0
    %p123 = por %p121, %p122
    %p124 = scmp.ne.s32.totalorder %s116, %s118
    %p125 = scmp.eq.s32.totalorder %s24, 1
    %p126 = por %p124, %p125
    %p127 = scmp.ne.s32.totalorder %s118, %s119
    %p128 = scmp.eq.s32.totalorder %s24, 0
    %p129 = por %p127, %p128
    %p130 = scmp.ne.s32.totalorder %s118, %s119
    %p131 = scmp.eq.s32.totalorder %s25, 1
    %p132 = por %p130, %p131
    %p134 = scmp.ne.s32.totalorder %s119, %s133
    %p135 = scmp.eq.s32.totalorder %s25, 0
    %p136 = por %p134, %p135
    %s138 = sadd.s32 %s137, 1
    %p141 = scmp.eq.s32.totalorder %s19, 1
    %p142 = scmp.ne.s32.totalorder %s137, %s139
    %p143 = scmp.eq.s32.totalorder %s19, 0
    %p144 = por %p142, %p143
    %p145 = scmp.ne.s32.totalorder %s137, %s139
    %p146 = scmp.eq.s32.totalorder %s24, 1
    %p147 = por %p145, %p146
    %p148 = scmp.ne.s32.totalorder %s139, %s140
    %p149 = scmp.eq.s32.totalorder %s24, 0
    %p150 = por %p148, %p149
    %p151 = scmp.ne.s32.totalorder %s139, %s140
    %p152 = scmp.eq.s32.totalorder %s25, 1
    %p153 = por %p151, %p152
    %p155 = scmp.ne.s32.totalorder %s140, %s154
    %p156 = scmp.eq.s32.totalorder %s25, 0
    %p157 = por %p155, %p156
    %s159 = sadd.s32 %s158, 1
    %p162 = scmp.eq.s32.totalorder %s19, 1
    %p163 = scmp.ne.s32.totalorder %s158, %s160
    %p164 = scmp.eq.s32.totalorder %s19, 0
    %p165 = por %p163, %p164
    %p166 = scmp.ne.s32.totalorder %s158, %s160
    %p167 = scmp.eq.s32.totalorder %s24, 1
    %p168 = por %p166, %p167
    %p169 = scmp.ne.s32.totalorder %s160, %s161
    %p170 = scmp.eq.s32.totalorder %s24, 0
    %p171 = por %p169, %p170
    %p172 = scmp.ne.s32.totalorder %s160, %s161
    %p173 = scmp.eq.s32.totalorder %s25, 1
    %p174 = por %p172, %p173
    %p176 = scmp.ne.s32.totalorder %s161, %s175
    %p177 = scmp.eq.s32.totalorder %s25, 0
    %p178 = por %p176, %p177
    %s180 = sadd.s32 %s179, 1
    %p183 = scmp.eq.s32.totalorder %s19, 1
    %p184 = scmp.ne.s32.totalorder %s179, %s181
    %p185 = scmp.eq.s32.totalorder %s19, 0
    %p186 = por %p184, %p185
    %p187 = scmp.ne.s32.totalorder %s179, %s181
    %p188 = scmp.eq.s32.totalorder %s24, 1
    %p189 = por %p187, %p188
    %p190 = scmp.ne.s32.totalorder %s181, %s182
    %p191 = scmp.eq.s32.totalorder %s24, 0
    %p192 = por %p190, %p191
    %p193 = scmp.ne.s32.totalorder %s181, %s182
    %p194 = scmp.eq.s32.totalorder %s25, 1
    %p195 = por %p193, %p194
    %p197 = scmp.ne.s32.totalorder %s182, %s196
    %p198 = scmp.eq.s32.totalorder %s25, 0
    %p199 = por %p197, %p198
    %s201 = sadd.s32 %s200, 1
    %p204 = scmp.eq.s32.totalorder %s19, 1
    %p205 = scmp.ne.s32.totalorder %s200, %s202
    %p206 = scmp.eq.s32.totalorder %s19, 0
    %p207 = por %p205, %p206
    %p208 = scmp.ne.s32.totalorder %s200, %s202
    %p209 = scmp.eq.s32.totalorder %s24, 1
    %p210 = por %p208, %p209
    %p211 = scmp.ne.s32.totalorder %s202, %s203
    %p212 = scmp.eq.s32.totalorder %s24, 0
    %p213 = por %p211, %p212
    %p214 = scmp.ne.s32.totalorder %s202, %s203
    %p215 = scmp.eq.s32.totalorder %s25, 1
    %p216 = por %p214, %p215
    %p218 = scmp.ne.s32.totalorder %s203, %s217
    %p219 = scmp.eq.s32.totalorder %s25, 0
    %p220 = por %p218, %p219
    %s222 = sadd.s32 %s221, 1
    %p225 = scmp.eq.s32.totalorder %s19, 1
    %p226 = scmp.ne.s32.totalorder %s221, %s223
    %p227 = scmp.eq.s32.totalorder %s19, 0
    %p228 = por %p226, %p227
    %p229 = scmp.ne.s32.totalorder %s221, %s223
    %p230 = scmp.eq.s32.totalorder %s24, 1
    %p231 = por %p229, %p230
    %p232 = scmp.ne.s32.totalorder %s223, %s224
    %p233 = scmp.eq.s32.totalorder %s24, 0
    %p234 = por %p232, %p233
    %p235 = scmp.ne.s32.totalorder %s223, %s224
    %p236 = scmp.eq.s32.totalorder %s25, 1
    %p237 = por %p235, %p236
    %p239 = scmp.ne.s32.totalorder %s224, %s238
    %p240 = scmp.eq.s32.totalorder %s25, 0
    %p241 = por %p239, %p240
    %s243 = sadd.s32 %s242, 1
    %p246 = scmp.eq.s32.totalorder %s19, 1
    %p247 = scmp.ne.s32.totalorder %s242, %s244
    %p248 = scmp.eq.s32.totalorder %s19, 0
    %p249 = por %p247, %p248
    %p250 = scmp.ne.s32.totalorder %s242, %s244
    %p251 = scmp.eq.s32.totalorder %s24, 1
    %p252 = por %p250, %p251
    %p253 = scmp.ne.s32.totalorder %s244, %s245
    %p254 = scmp.eq.s32.totalorder %s24, 0
    %p255 = por %p253, %p254
    %p256 = scmp.ne.s32.totalorder %s244, %s245
    %p257 = scmp.eq.s32.totalorder %s25, 1
    %p258 = por %p256, %p257
    %p260 = scmp.ne.s32.totalorder %s245, %s259
    %p261 = scmp.eq.s32.totalorder %s25, 0
    %p262 = por %p260, %p261
    %s264 = sadd.s32 %s263, 1
    %p267 = scmp.eq.s32.totalorder %s19, 1
    %p268 = scmp.ne.s32.totalorder %s263, %s265
    %p269 = scmp.eq.s32.totalorder %s19, 0
    %p270 = por %p268, %p269
    %p271 = scmp.ne.s32.totalorder %s263, %s265
    %p272 = scmp.eq.s32.totalorder %s24, 1
    %p273 = por %p271, %p272
    %p274 = scmp.ne.s32.totalorder %s265, %s266
    %p275 = scmp.eq.s32.totalorder %s24, 0
    %p276 = por %p274, %p275
    %p277 = scmp.ne.s32.totalorder %s265, %s266
    %p278 = scmp.eq.s32.totalorder %s25, 1
    %p279 = por %p277, %p278
    %p281 = scmp.ne.s32.totalorder %s266, %s280
    %p282 = scmp.eq.s32.totalorder %s25, 0
    %p283 = por %p281, %p282
    %s285 = sadd.s32 %s284, 1
    %p288 = scmp.eq.s32.totalorder %s19, 1
    %p289 = scmp.ne.s32.totalorder %s284, %s286
    %p290 = scmp.eq.s32.totalorder %s19, 0
    %p291 = por %p289, %p290
    %p292 = scmp.ne.s32.totalorder %s284, %s286
    %p293 = scmp.eq.s32.totalorder %s24, 1
    %p294 = por %p292, %p293
    %p295 = scmp.ne.s32.totalorder %s286, %s287
    %p296 = scmp.eq.s32.totalorder %s24, 0
    %p297 = por %p295, %p296
    %p298 = scmp.ne.s32.totalorder %s286, %s287
    %p299 = scmp.eq.s32.totalorder %s25, 1
    %p300 = por %p298, %p299
    %p302 = scmp.ne.s32.totalorder %s287, %s301
    %p303 = scmp.eq.s32.totalorder %s25, 0
    %p304 = por %p302, %p303
    %s305 = ssub.s32 %s19, %s26
    %p306 = scmp.eq.s32.totalorder %s305, 0
    %s308 = sadd.s32 %s307, 1
    %s309 = scalar_select %p306, %s307, %s308
    %p312 = pneg %p306
    %p313 = scmp.eq.s32.totalorder %s19, 1
    %p314 = por %p312, %p313
    %p315 = scmp.ne.s32.totalorder %s307, %s310
    %p316 = scmp.eq.s32.totalorder %s19, 0
    %p317 = por %p315, %p316
    %p318 = scmp.ne.s32.totalorder %s307, %s310
    %p319 = scmp.eq.s32.totalorder %s24, 1
    %p320 = por %p318, %p319
    %p321 = scmp.ne.s32.totalorder %s310, %s311
    %p322 = scmp.eq.s32.totalorder %s24, 0
    %p323 = por %p321, %p322
    %p324 = scmp.ne.s32.totalorder %s310, %s311
    %p325 = scmp.eq.s32.totalorder %s25, 1
    %p326 = por %p324, %p325
    %p328 = scmp.ne.s32.totalorder %s311, %s327
    %p329 = scmp.eq.s32.totalorder %s25, 0
    %p330 = por %p328, %p329
    %p331 = scmp.le.s32.totalorder 1, %s19
    %p332 = scmp.lt.s32.totalorder %s19, 3
    %p333 = pnand %p331, %p332
    %p334 = pneg %p333
    // Predicated region
    $region9: #{qnetwork_fc_forward.1} parent=5 // pred_check
      _
    $region10: #{qnetwork_fc_forward.1} parent=5 // pred_check_branch
      %336 = sbr.rel (%p333) target = $region12
    $region11: #{qnetwork_fc_forward.1} parent=5 // pred_region
      %s337 = ssub.s32 %s19, 1
      // Predicated region
      $region13: #{qnetwork_fc_forward.1} parent=11 // pred_check
        %p338 = pneg %p66
      $region14: #{qnetwork_fc_forward.1} parent=11 // pred_check_branch
        %340 = sbr.rel (%p338) target = $region16
      $region15: #{qnetwork_fc_forward.1} parent=11 // pred_region
        _
      $region16: #{qnetwork_fc_forward.1} parent=11 // pred_fallthru
        _
      // Predicated region
      $region17: #{qnetwork_fc_forward.1} parent=11 // pred_check
        %p341 = pneg %p87
      $region18: #{qnetwork_fc_forward.1} parent=11 // pred_check_branch
        %343 = sbr.rel (%p341) target = $region20
      $region19: #{qnetwork_fc_forward.1} parent=11 // pred_region
        _
      $region20: #{qnetwork_fc_forward.1} parent=11 // pred_fallthru
        _
      // Predicated region
      $region21: #{qnetwork_fc_forward.1} parent=11 // pred_check
        %p344 = pneg %p108
      $region22: #{qnetwork_fc_forward.1} parent=11 // pred_check_branch
        %346 = sbr.rel (%p344) target = $region24
      $region23: #{qnetwork_fc_forward.1} parent=11 // pred_region
        _
      $region24: #{qnetwork_fc_forward.1} parent=11 // pred_fallthru
        _
      // Predicated region
      $region25: #{qnetwork_fc_forward.1} parent=11 // pred_check
        %p347 = pneg %p129
      $region26: #{qnetwork_fc_forward.1} parent=11 // pred_check_branch
        %349 = sbr.rel (%p347) target = $region28
      $region27: #{qnetwork_fc_forward.1} parent=11 // pred_region
        _
      $region28: #{qnetwork_fc_forward.1} parent=11 // pred_fallthru
        _
      // Predicated region
      $region29: #{qnetwork_fc_forward.1} parent=11 // pred_check
        %p350 = pneg %p150
      $region30: #{qnetwork_fc_forward.1} parent=11 // pred_check_branch
        %352 = sbr.rel (%p350) target = $region32
      $region31: #{qnetwork_fc_forward.1} parent=11 // pred_region
        _
      $region32: #{qnetwork_fc_forward.1} parent=11 // pred_fallthru
        _
      // Predicated region
      $region33: #{qnetwork_fc_forward.1} parent=11 // pred_check
        %p353 = pneg %p171
      $region34: #{qnetwork_fc_forward.1} parent=11 // pred_check_branch
        %355 = sbr.rel (%p353) target = $region36
      $region35: #{qnetwork_fc_forward.1} parent=11 // pred_region
        _
      $region36: #{qnetwork_fc_forward.1} parent=11 // pred_fallthru
        _
      // Predicated region
      $region37: #{qnetwork_fc_forward.1} parent=11 // pred_check
        %p356 = pneg %p192
      $region38: #{qnetwork_fc_forward.1} parent=11 // pred_check_branch
        %358 = sbr.rel (%p356) target = $region40
      $region39: #{qnetwork_fc_forward.1} parent=11 // pred_region
        _
      $region40: #{qnetwork_fc_forward.1} parent=11 // pred_fallthru
        _
      // Predicated region
      $region41: #{qnetwork_fc_forward.1} parent=11 // pred_check
        %p359 = pneg %p213
      $region42: #{qnetwork_fc_forward.1} parent=11 // pred_check_branch
        %361 = sbr.rel (%p359) target = $region44
      $region43: #{qnetwork_fc_forward.1} parent=11 // pred_region
        _
      $region44: #{qnetwork_fc_forward.1} parent=11 // pred_fallthru
        _
      // Predicated region
      $region45: #{qnetwork_fc_forward.1} parent=11 // pred_check
        %p362 = pneg %p234
      $region46: #{qnetwork_fc_forward.1} parent=11 // pred_check_branch
        %364 = sbr.rel (%p362) target = $region48
      $region47: #{qnetwork_fc_forward.1} parent=11 // pred_region
        _
      $region48: #{qnetwork_fc_forward.1} parent=11 // pred_fallthru
        _
      // Predicated region
      $region49: #{qnetwork_fc_forward.1} parent=11 // pred_check
        %p365 = pneg %p255
      $region50: #{qnetwork_fc_forward.1} parent=11 // pred_check_branch
        %367 = sbr.rel (%p365) target = $region52
      $region51: #{qnetwork_fc_forward.1} parent=11 // pred_region
        _
      $region52: #{qnetwork_fc_forward.1} parent=11 // pred_fallthru
        _
      // Predicated region
      $region53: #{qnetwork_fc_forward.1} parent=11 // pred_check
        %p368 = pneg %p276
      $region54: #{qnetwork_fc_forward.1} parent=11 // pred_check_branch
        %370 = sbr.rel (%p368) target = $region56
      $region55: #{qnetwork_fc_forward.1} parent=11 // pred_region
        _
      $region56: #{qnetwork_fc_forward.1} parent=11 // pred_fallthru
        _
      // Predicated region
      $region57: #{qnetwork_fc_forward.1} parent=11 // pred_check
        %p371 = pneg %p297
      $region58: #{qnetwork_fc_forward.1} parent=11 // pred_check_branch
        %373 = sbr.rel (%p371) target = $region60
      $region59: #{qnetwork_fc_forward.1} parent=11 // pred_region
        _
      $region60: #{qnetwork_fc_forward.1} parent=11 // pred_fallthru
        _
    $region12: #{qnetwork_fc_forward.1} parent=5 // pred_fallthru
      _
    %p374 = scmp.lt.s32.totalorder %s19, 2
    // Predicated region
    $region61: #{qnetwork_fc_forward.1} parent=5 // pred_check
      %p375 = pneg %p374
    $region62: #{qnetwork_fc_forward.1} parent=5 // pred_check_branch
      %377 = sbr.rel (%p375) target = $region64
    $region63: #{qnetwork_fc_forward.1} parent=5 // pred_region
      // Predicated region
      $region65: #{qnetwork_fc_forward.1} parent=63 // pred_check
        %p378 = pneg %p39
      $region66: #{qnetwork_fc_forward.1} parent=63 // pred_check_branch
        %380 = sbr.rel (%p378) target = $region68
      $region67: #{qnetwork_fc_forward.1} parent=63 // pred_region
        %s381 = smul.u32 16, %s19
        %p382 = scmp.lt.s32.totalorder %s381, 31
        %s383 = scalar_select %p382, %s381, 31
        %s384 = smul.addr %s383, 8
        %s385 = scalar_lea.vmem %s0, %s384
        %s386 = smul.u32 16, %s19
      $region68: #{qnetwork_fc_forward.1} parent=63 // pred_fallthru
        _
    $region64: #{qnetwork_fc_forward.1} parent=5 // pred_fallthru
      _
    %p387 = scmp.le.s32.totalorder 1, %s19
    %p388 = scmp.lt.s32.totalorder %s19, 3
    %p389 = pnand %p387, %p388
    %p390 = pneg %p389
    // Predicated region
    $region69: #{qnetwork_fc_forward.1} parent=5 // pred_check
      _
    $region70: #{qnetwork_fc_forward.1} parent=5 // pred_check_branch
      %392 = sbr.rel (%p389) target = $region72
    $region71: #{qnetwork_fc_forward.1} parent=5 // pred_region
      %s393 = ssub.s32 %s19, 1
      %s394 = smul.u32 16, %s24
      %p395 = scmp.lt.s32.totalorder %s394, 31
      %s396 = scalar_select %p395, %s394, 31
      %s397 = smul.addr %s396, 8
      %s398 = scalar_lea.vmem %s0, %s397
      %p399 = pneg %p45
      %p400 = pneg %p42
      %p401 = pneg %p66
      %p402 = pneg %p63
      %p403 = pneg %p87
      %p404 = pneg %p84
      %p405 = pneg %p108
      %p406 = pneg %p105
      %p407 = pneg %p129
      %p408 = pneg %p126
      %p409 = pneg %p150
      %p410 = pneg %p147
      %p411 = pneg %p171
      %p412 = pneg %p168
      %p413 = pneg %p192
      %p414 = pneg %p189
      %p415 = pneg %p213
      %p416 = pneg %p210
      %p417 = pneg %p234
      %p418 = pneg %p231
      %p419 = pneg %p255
      %p420 = pneg %p252
      %p421 = pneg %p276
      %p422 = pneg %p273
      %p423 = pneg %p297
      %p424 = pneg %p294
      %p425 = pneg %p323
      %p426 = pneg %p320
      %s427 = smul.u32 16, %s24
      %p428 = scmp.lt.s32.totalorder %s427, 31
      %s429 = scalar_select %p428, %s427, 31
      %s430 = smul.addr %s429, 4
      %s431 = scalar_lea.vmem %s13, %s430
      %s432 = smul.u32 16, %s24
      %p433 = scmp.lt.s32.totalorder %s432, 31
      %s434 = scalar_select %p433, %s432, 31
      %s435 = smul.addr %s434, 8
      %s436 = scalar_lea.vmem %s0, %s435
      %s437 = smul.u32 16, %s24
      %s438 = smul.u32 16, %s24
      %p439 = scmp.lt.s32.totalorder %s438, 31
      %s440 = scalar_select %p439, %s438, 31
      %s441 = smul.addr %s440, 4
      %s442 = scalar_lea.vmem %s13, %s441
      %s443 = smul.u32 16, %s24
      %v445 = vld [vmem:[%s436] sm:$0xff]
      %v446 = vld [vmem:[%s436 + $0x8] sm:$0xff]
      %v447 = vld [vmem:[%s436 + $0x10] sm:$0xff]
      %v448 = vld [vmem:[%s436 + $0x18] sm:$0xff]
      %v449 = vld [vmem:[%s436 + $0x20] sm:$0xff]
      %v450 = vld [vmem:[%s436 + $0x28] sm:$0xff]
      %v451 = vld [vmem:[%s436 + $0x30] sm:$0xff]
      %v452 = vld [vmem:[%s436 + $0x38] sm:$0xff]
      %v453 = vld [vmem:[%s436 + $0x40] sm:$0xff]
      %v454 = vld [vmem:[%s436 + $0x48] sm:$0xff]
      %v455 = vld [vmem:[%s436 + $0x50] sm:$0xff]
      %v456 = vld [vmem:[%s436 + $0x58] sm:$0xff]
      %v457 = vld [vmem:[%s436 + $0x60] sm:$0xff]
      %v458 = vld [vmem:[%s436 + $0x68] sm:$0xff]
      %v459 = vld [vmem:[%s436 + $0x70] sm:$0xff]
      %v460 = vld [vmem:[%s436 + $0x78] sm:$0xff]
      %v461 = vpack.c.bf16 %v446, %v445
      %v462 = vpack.c.bf16 %v448, %v447
      %v463 = vpack.c.bf16 %v450, %v449
      %v464 = vpack.c.bf16 %v452, %v451
      %v465 = vpack.c.bf16 %v454, %v453
      %v466 = vpack.c.bf16 %v456, %v455
      %v467 = vpack.c.bf16 %v458, %v457
      %v468 = vpack.c.bf16 %v460, %v459
      %v469 = vld [vmem:[%s1] sm:$0xf]
      %v470 = vld [vmem:[%s1 + $0x4] sm:$0xf]
      %v471 = vld [vmem:[%s1 + $0x8] sm:$0xf]
      %v472 = vld [vmem:[%s1 + $0xc] sm:$0xf]
      %v473 = vld [vmem:[%s1 + $0x10] sm:$0x7]
      %v474 = vld [vmem:[%s2] sm:$0x1]
      %v476 = vlaneseq
      %v477 = vshrl.u32 %v476, 7
      %v478 = vsub.s32 0, %v477
      %v479 = vrot.slane %v474, %v478
      %v486 = vunpack.c.l.b16 %v469
      %v487 = vunpack.c.l.b16 %v470
      %v488 = vunpack.c.l.b16 %v471
      %v489 = vunpack.c.l.b16 %v472
      %v490 = vunpack.c.l.b16 %v473
      %v491 = vpack.c.b16 %v487, %v486
      %v492 = vpack.c.b16 %v489, %v488
      %v493 = vpack.c.b16 %v490, %v490
      %vm496 = vcmask 302080
      %v498 = vsel %vm496, %v461, 0
      %v501 = vsel %vm496, %v462, 0
      %v504 = vsel %vm496, %v463, 0
      %v507 = vsel %vm496, %v464, 0
      %v510 = vsel %vm496, %v465, 0
      %v513 = vsel %vm496, %v466, 0
      %v516 = vsel %vm496, %v467, 0
      %v519 = vsel %vm496, %v468, 0
      %vm521 = vcmask 1041408
      %vm522 = vcmask 1042432
      %v523 = vsel %vm521, 4294967295, 65535
      %v524 = vsel %vm522, %v523, 0
      %v526 = vand.u32 %v493, %v524
      %528 = vmatprep.subr.bf16.mxu0 0
      %529 = vmatpush1.bf16.msra.mxu0 %v491
      %530 = vmatprep.subr.bf16.mxu0 0
      %531 = vmatpush1.bf16.msra.mxu0 %v492
      %532 = vmatprep.subr.bf16.mxu0 0
      %533 = vmatpush1.bf16.msra.mxu0 %v526
      %534 = vmatprep.subr.bf16.mxu0 0
      %535 = vmatpush1.bf16.msra.mxu0 0
      %536 = vmatprep.subr.bf16.mxu0 0
      %537 = vmatpush1.bf16.msra.mxu0 0
      %538 = vmatprep.subr.bf16.mxu0 0
      %539 = vmatpush1.bf16.msra.mxu0 0
      %540 = vmatprep.subr.bf16.mxu0 0
      %541 = vmatpush1.bf16.msra.mxu0 0
      %542 = vmatprep.subr.bf16.mxu0 0
      %543 = vmatpush1.bf16.msra.mxu0 0
      %544 = vmatprep.subr.bf16.mxu0 0
      %545 = vmatpush1.bf16.msra.mxu0 0
      %546 = vmatprep.subr.bf16.mxu0 0
      %547 = vmatpush1.bf16.msra.mxu0 0
      %548 = vmatprep.subr.bf16.mxu0 0
      %549 = vmatpush1.bf16.msra.mxu0 0
      %550 = vmatprep.subr.bf16.mxu0 0
      %551 = vmatpush1.bf16.msra.mxu0 0
      %552 = vmatprep.subr.bf16.mxu0 0
      %553 = vmatpush1.bf16.msra.mxu0 0
      %554 = vmatprep.subr.bf16.mxu0 0
      %555 = vmatpush1.bf16.msra.mxu0 0
      %556 = vmatprep.subr.bf16.mxu0 0
      %557 = vmatpush1.bf16.msra.mxu0 0
      %558 = vmatprep.subr.bf16.mxu0 0
      %559 = vmatpush1.bf16.msra.mxu0 0
      %560 = vmatprep.mubr.bf16.mxu0 0
      %561 = vmatmul.mubr.bf16.gmra.mrb[0].mxu0 %v498
      %v562 = vpop.f32.mrb[0].mxu0
      %v563 = vadd.f32 %v479, %v562
      %v564 = vpop.f32.mrb[0].mxu0
      %v565 = vpop.f32.mrb[0].mxu0
      %v566 = vadd.f32 %v479, %v565
      %v567 = vpop.f32.mrb[0].mxu0
      %568 = vmatprep.mubr.bf16.mxu0 0
      %569 = vmatmul.mubr.bf16.gmra.mrb[0].mxu0 %v501
      %v570 = vpop.f32.mrb[0].mxu0
      %v571 = vadd.f32 %v479, %v570
      %v572 = vpop.f32.mrb[0].mxu0
      %v573 = vpop.f32.mrb[0].mxu0
      %v574 = vadd.f32 %v479, %v573
      %v575 = vpop.f32.mrb[0].mxu0
      %576 = vmatprep.mubr.bf16.mxu0 0
      %577 = vmatmul.mubr.bf16.gmra.mrb[0].mxu0 %v504
      %v578 = vpop.f32.mrb[0].mxu0
      %v579 = vadd.f32 %v479, %v578
      %v580 = vpop.f32.mrb[0].mxu0
      %v581 = vpop.f32.mrb[0].mxu0
      %v582 = vadd.f32 %v479, %v581
      %v583 = vpop.f32.mrb[0].mxu0
      %584 = vmatprep.mubr.bf16.mxu0 0
      %585 = vmatmul.mubr.bf16.gmra.mrb[0].mxu0 %v507
      %v586 = vpop.f32.mrb[0].mxu0
      %v587 = vadd.f32 %v479, %v586
      %v588 = vpop.f32.mrb[0].mxu0
      %v589 = vpop.f32.mrb[0].mxu0
      %v590 = vadd.f32 %v479, %v589
      %v591 = vpop.f32.mrb[0].mxu0
      %592 = vmatprep.mubr.bf16.mxu0 0
      %593 = vmatmul.mubr.bf16.gmra.mrb[0].mxu0 %v510
      %v594 = vpop.f32.mrb[0].mxu0
      %v595 = vadd.f32 %v479, %v594
      %v596 = vpop.f32.mrb[0].mxu0
      %v597 = vpop.f32.mrb[0].mxu0
      %v598 = vadd.f32 %v479, %v597
      %v599 = vpop.f32.mrb[0].mxu0
      %600 = vmatprep.mubr.bf16.mxu0 0
      %601 = vmatmul.mubr.bf16.gmra.mrb[0].mxu0 %v513
      %v602 = vpop.f32.mrb[0].mxu0
      %v603 = vadd.f32 %v479, %v602
      %v604 = vpop.f32.mrb[0].mxu0
      %v605 = vpop.f32.mrb[0].mxu0
      %v606 = vadd.f32 %v479, %v605
      %v607 = vpop.f32.mrb[0].mxu0
      %608 = vmatprep.mubr.bf16.mxu0 0
      %609 = vmatmul.mubr.bf16.gmra.mrb[0].mxu0 %v516
      %v610 = vpop.f32.mrb[0].mxu0
      %v611 = vadd.f32 %v479, %v610
      %v612 = vpop.f32.mrb[0].mxu0
      %v613 = vpop.f32.mrb[0].mxu0
      %v614 = vadd.f32 %v479, %v613
      %v615 = vpop.f32.mrb[0].mxu0
      %616 = vmatprep.mubr.bf16.mxu0 0
      %617 = vmatmul.mubr.bf16.gmra.mrb[0].mxu0 %v519
      %v618 = vpop.f32.mrb[0].mxu0
      %v619 = vadd.f32 %v479, %v618
      %v620 = vpop.f32.mrb[0].mxu0
      %v621 = vpop.f32.mrb[0].mxu0
      %v622 = vadd.f32 %v479, %v621
      %v623 = vpop.f32.mrb[0].mxu0
      %624 = vdwg.mxu0
      %v625 = vpack.c.bf16 %v566, %v563
      %v626 = vpack.c.bf16 %v574, %v571
      %v627 = vpack.c.bf16 %v582, %v579
      %v628 = vpack.c.bf16 %v590, %v587
      %v629 = vpack.c.bf16 %v598, %v595
      %v630 = vpack.c.bf16 %v606, %v603
      %v631 = vpack.c.bf16 %v614, %v611
      %v632 = vpack.c.bf16 %v622, %v619
      %v633 = vmax.bf16 %v625, 0
      %v634 = vmax.bf16 %v626, 0
      %v635 = vmax.bf16 %v627, 0
      %v636 = vmax.bf16 %v628, 0
      %v637 = vmax.bf16 %v629, 0
      %v638 = vmax.bf16 %v630, 0
      %v639 = vmax.bf16 %v631, 0
      %v640 = vmax.bf16 %v632, 0
      %v641 = vld [vmem:[%s3] sm:$0xf]
      %v642 = vld [vmem:[%s3 + $0x4] sm:$0xf]
      %v643 = vld [vmem:[%s3 + $0x8] sm:$0xf]
      %v644 = vld [vmem:[%s3 + $0xc] sm:$0xf]
      %v645 = vld [vmem:[%s3 + $0x10] sm:$0xf]
      %v646 = vld [vmem:[%s3 + $0x14] sm:$0xf]
      %v647 = vld [vmem:[%s3 + $0x18] sm:$0xf]
      %v648 = vld [vmem:[%s3 + $0x1c] sm:$0xf]
      %v649 = vld [vmem:[%s3 + $0x20] sm:$0xf]
      %v650 = vld [vmem:[%s3 + $0x24] sm:$0xf]
      %v651 = vld [vmem:[%s3 + $0x28] sm:$0xf]
      %v652 = vld [vmem:[%s3 + $0x2c] sm:$0xf]
      %v653 = vld [vmem:[%s3 + $0x30] sm:$0xf]
      %v654 = vld [vmem:[%s3 + $0x34] sm:$0xf]
      %v655 = vld [vmem:[%s3 + $0x38] sm:$0xf]
      %v656 = vld [vmem:[%s3 + $0x3c] sm:$0xf]
      %v657 = vld [vmem:[%s4] sm:$0x1]
      %v659 = vlaneseq
      %v660 = vshrl.u32 %v659, 7
      %v661 = vsub.s32 0, %v660
      %v662 = vrot.slane %v657, %v661
      %v680 = vunpack.c.l.b16 %v641
      %v681 = vunpack.c.l.b16 %v642
      %v682 = vunpack.c.l.b16 %v643
      %v683 = vunpack.c.l.b16 %v644
      %v684 = vunpack.c.l.b16 %v645
      %v685 = vunpack.c.l.b16 %v646
      %v686 = vunpack.c.l.b16 %v647
      %v687 = vunpack.c.l.b16 %v648
      %v688 = vunpack.c.l.b16 %v649
      %v689 = vunpack.c.l.b16 %v650
      %v690 = vunpack.c.l.b16 %v651
      %v691 = vunpack.c.l.b16 %v652
      %v692 = vunpack.c.l.b16 %v653
      %v693 = vunpack.c.l.b16 %v654
      %v694 = vunpack.c.l.b16 %v655
      %v695 = vunpack.c.l.b16 %v656
      %v696 = vpack.c.b16 %v681, %v680
      %v697 = vpack.c.b16 %v683, %v682
      %v698 = vpack.c.b16 %v685, %v684
      %v699 = vpack.c.b16 %v687, %v686
      %v700 = vpack.c.b16 %v689, %v688
      %v701 = vpack.c.b16 %v691, %v690
      %v702 = vpack.c.b16 %v693, %v692
      %v703 = vpack.c.b16 %v695, %v694
      %712 = vmatprep.subr.bf16.mxu0 0
      %713 = vmatpush1.bf16.msra.mxu0 %v696
      %714 = vmatprep.subr.bf16.mxu0 0
      %715 = vmatpush1.bf16.msra.mxu0 %v697
      %716 = vmatprep.subr.bf16.mxu0 0
      %717 = vmatpush1.bf16.msra.mxu0 %v698
      %718 = vmatprep.subr.bf16.mxu0 0
      %719 = vmatpush1.bf16.msra.mxu0 %v699
      %720 = vmatprep.subr.bf16.mxu0 0
      %721 = vmatpush1.bf16.msra.mxu0 %v700
      %722 = vmatprep.subr.bf16.mxu0 0
      %723 = vmatpush1.bf16.msra.mxu0 %v701
      %724 = vmatprep.subr.bf16.mxu0 0
      %725 = vmatpush1.bf16.msra.mxu0 %v702
      %726 = vmatprep.subr.bf16.mxu0 0
      %727 = vmatpush1.bf16.msra.mxu0 %v703
      %728 = vmatprep.subr.bf16.mxu0 0
      %729 = vmatpush1.bf16.msra.mxu0 0
      %730 = vmatprep.subr.bf16.mxu0 0
      %731 = vmatpush1.bf16.msra.mxu0 0
      %732 = vmatprep.subr.bf16.mxu0 0
      %733 = vmatpush1.bf16.msra.mxu0 0
      %734 = vmatprep.subr.bf16.mxu0 0
      %735 = vmatpush1.bf16.msra.mxu0 0
      %736 = vmatprep.subr.bf16.mxu0 0
      %737 = vmatpush1.bf16.msra.mxu0 0
      %738 = vmatprep.subr.bf16.mxu0 0
      %739 = vmatpush1.bf16.msra.mxu0 0
      %740 = vmatprep.subr.bf16.mxu0 0
      %741 = vmatpush1.bf16.msra.mxu0 0
      %742 = vmatprep.subr.bf16.mxu0 0
      %743 = vmatpush1.bf16.msra.mxu0 0
      %744 = vmatprep.mubr.bf16.mxu0 0
      %745 = vmatmul.mubr.bf16.gmra.mrb[0].mxu0 %v633
      %v746 = vpop.f32.mrb[0].mxu0
      %v747 = vadd.f32 %v662, %v746
      %v748 = vpop.f32.mrb[0].mxu0
      %v749 = vpop.f32.mrb[0].mxu0
      %v750 = vadd.f32 %v662, %v749
      %v751 = vpop.f32.mrb[0].mxu0
      %752 = vmatprep.mubr.bf16.mxu0 0
      %753 = vmatmul.mubr.bf16.gmra.mrb[0].mxu0 %v634
      %v754 = vpop.f32.mrb[0].mxu0
      %v755 = vadd.f32 %v662, %v754
      %v756 = vpop.f32.mrb[0].mxu0
      %v757 = vpop.f32.mrb[0].mxu0
      %v758 = vadd.f32 %v662, %v757
      %v759 = vpop.f32.mrb[0].mxu0
      %760 = vmatprep.mubr.bf16.mxu0 0
      %761 = vmatmul.mubr.bf16.gmra.mrb[0].mxu0 %v635
      %v762 = vpop.f32.mrb[0].mxu0
      %v763 = vadd.f32 %v662, %v762
      %v764 = vpop.f32.mrb[0].mxu0
      %v765 = vpop.f32.mrb[0].mxu0
      %v766 = vadd.f32 %v662, %v765
      %v767 = vpop.f32.mrb[0].mxu0
      %768 = vmatprep.mubr.bf16.mxu0 0
      %769 = vmatmul.mubr.bf16.gmra.mrb[0].mxu0 %v636
      %v770 = vpop.f32.mrb[0].mxu0
      %v771 = vadd.f32 %v662, %v770
      %v772 = vpop.f32.mrb[0].mxu0
      %v773 = vpop.f32.mrb[0].mxu0
      %v774 = vadd.f32 %v662, %v773
      %v775 = vpop.f32.mrb[0].mxu0
      %776 = vmatprep.mubr.bf16.mxu0 0
      %777 = vmatmul.mubr.bf16.gmra.mrb[0].mxu0 %v637
      %v778 = vpop.f32.mrb[0].mxu0
      %v779 = vadd.f32 %v662, %v778
      %v780 = vpop.f32.mrb[0].mxu0
      %v781 = vpop.f32.mrb[0].mxu0
      %v782 = vadd.f32 %v662, %v781
      %v783 = vpop.f32.mrb[0].mxu0
      %784 = vmatprep.mubr.bf16.mxu0 0
      %785 = vmatmul.mubr.bf16.gmra.mrb[0].mxu0 %v638
      %v786 = vpop.f32.mrb[0].mxu0
      %v787 = vadd.f32 %v662, %v786
      %v788 = vpop.f32.mrb[0].mxu0
      %v789 = vpop.f32.mrb[0].mxu0
      %v790 = vadd.f32 %v662, %v789
      %v791 = vpop.f32.mrb[0].mxu0
      %792 = vmatprep.mubr.bf16.mxu0 0
      %793 = vmatmul.mubr.bf16.gmra.mrb[0].mxu0 %v639
      %v794 = vpop.f32.mrb[0].mxu0
      %v795 = vadd.f32 %v662, %v794
      %v796 = vpop.f32.mrb[0].mxu0
      %v797 = vpop.f32.mrb[0].mxu0
      %v798 = vadd.f32 %v662, %v797
      %v799 = vpop.f32.mrb[0].mxu0
      %800 = vmatprep.mubr.bf16.mxu0 0
      %801 = vmatmul.mubr.bf16.gmra.mrb[0].mxu0 %v640
      %v802 = vpop.f32.mrb[0].mxu0
      %v803 = vadd.f32 %v662, %v802
      %v804 = vpop.f32.mrb[0].mxu0
      %v805 = vpop.f32.mrb[0].mxu0
      %v806 = vadd.f32 %v662, %v805
      %v807 = vpop.f32.mrb[0].mxu0
      %808 = vdwg.mxu0
      %v809 = vmax.f32 %v747, 0.0
      %v810 = vmax.f32 %v750, 0.0
      %v811 = vmax.f32 %v755, 0.0
      %v812 = vmax.f32 %v758, 0.0
      %v813 = vmax.f32 %v763, 0.0
      %v814 = vmax.f32 %v766, 0.0
      %v815 = vmax.f32 %v771, 0.0
      %v816 = vmax.f32 %v774, 0.0
      %v817 = vmax.f32 %v779, 0.0
      %v818 = vmax.f32 %v782, 0.0
      %v819 = vmax.f32 %v787, 0.0
      %v820 = vmax.f32 %v790, 0.0
      %v821 = vmax.f32 %v795, 0.0
      %v822 = vmax.f32 %v798, 0.0
      %v823 = vmax.f32 %v803, 0.0
      %v824 = vmax.f32 %v806, 0.0
      %v825 = vpack.c.bf16 %v810, %v809
      %v826 = vpack.c.bf16 %v812, %v811
      %v827 = vpack.c.bf16 %v814, %v813
      %v828 = vpack.c.bf16 %v816, %v815
      %v829 = vpack.c.bf16 %v818, %v817
      %v830 = vpack.c.bf16 %v820, %v819
      %v831 = vpack.c.bf16 %v822, %v821
      %v832 = vpack.c.bf16 %v824, %v823
      %v833 = vld [vmem:[%s5] sm:$0xff]
      %v834 = vld [vmem:[%s5 + $0x8] sm:$0xff]
      %v835 = vld [vmem:[%s5 + $0x10] sm:$0xff]
      %v836 = vld [vmem:[%s5 + $0x18] sm:$0xff]
      %v837 = vld [vmem:[%s5 + $0x20] sm:$0xff]
      %v838 = vld [vmem:[%s5 + $0x28] sm:$0xff]
      %v839 = vld [vmem:[%s5 + $0x30] sm:$0xff]
      %v840 = vld [vmem:[%s5 + $0x38] sm:$0xff]
      %v841 = vld [vmem:[%s5 + $0x40] sm:$0xff]
      %v842 = vld [vmem:[%s5 + $0x48] sm:$0xff]
      %v843 = vld [vmem:[%s5 + $0x50] sm:$0xff]
      %v844 = vld [vmem:[%s5 + $0x58] sm:$0xff]
      %v845 = vld [vmem:[%s5 + $0x60] sm:$0xff]
      %v846 = vld [vmem:[%s5 + $0x68] sm:$0xff]
      %v847 = vld [vmem:[%s5 + $0x70] sm:$0xff]
      %v848 = vld [vmem:[%s5 + $0x78] sm:$0xff]
      %v849 = vld [vmem:[%s6] sm:$0x3]
      %v851 = vlaneseq
      %v852 = vshrl.u32 %v851, 7
      %v853 = vsub.s32 0, %v852
      %v854 = vrot.slane %v849, %v853
      %v855 = vlaneseq
      %v856 = vshrl.u32 %v855, 7
      %v857 = vsub.s32 1, %v856
      %v858 = vrot.slane %v849, %v857
      %v877 = vunpack.c.l.b16 %v833
      %v878 = vunpack.c.h.b16 %v833
      %v879 = vunpack.c.l.b16 %v834
      %v880 = vunpack.c.h.b16 %v834
      %v881 = vunpack.c.l.b16 %v835
      %v882 = vunpack.c.h.b16 %v835
      %v883 = vunpack.c.l.b16 %v836
      %v884 = vunpack.c.h.b16 %v836
      %v885 = vunpack.c.l.b16 %v837
      %v886 = vunpack.c.h.b16 %v837
      %v887 = vunpack.c.l.b16 %v838
      %v888 = vunpack.c.h.b16 %v838
      %v889 = vunpack.c.l.b16 %v839
      %v890 = vunpack.c.h.b16 %v839
      %v891 = vunpack.c.l.b16 %v840
      %v892 = vunpack.c.h.b16 %v840
      %v893 = vunpack.c.l.b16 %v841
      %v894 = vunpack.c.h.b16 %v841
      %v895 = vunpack.c.l.b16 %v842
      %v896 = vunpack.c.h.b16 %v842
      %v897 = vunpack.c.l.b16 %v843
      %v898 = vunpack.c.h.b16 %v843
      %v899 = vunpack.c.l.b16 %v844
      %v900 = vunpack.c.h.b16 %v844
      %v901 = vunpack.c.l.b16 %v845
      %v902 = vunpack.c.h.b16 %v845
      %v903 = vunpack.c.l.b16 %v846
      %v904 = vunpack.c.h.b16 %v846
      %v905 = vunpack.c.l.b16 %v847
      %v906 = vunpack.c.h.b16 %v847
      %v907 = vunpack.c.l.b16 %v848
      %v908 = vunpack.c.h.b16 %v848
      %v909 = vpack.c.b16 %v879, %v877
      %v910 = vpack.c.b16 %v880, %v878
      %v911 = vpack.c.b16 %v883, %v881
      %v912 = vpack.c.b16 %v884, %v882
      %v913 = vpack.c.b16 %v887, %v885
      %v914 = vpack.c.b16 %v888, %v886
      %v915 = vpack.c.b16 %v891, %v889
      %v916 = vpack.c.b16 %v892, %v890
      %v917 = vpack.c.b16 %v895, %v893
      %v918 = vpack.c.b16 %v896, %v894
      %v919 = vpack.c.b16 %v899, %v897
      %v920 = vpack.c.b16 %v900, %v898
      %v921 = vpack.c.b16 %v903, %v901
      %v922 = vpack.c.b16 %v904, %v902
      %v923 = vpack.c.b16 %v907, %v905
      %v924 = vpack.c.b16 %v908, %v906
      %941 = vmatprep.subr.bf16.mxu0 %v910
      %942 = vmatpush1.bf16.msra.mxu0 %v909
      %943 = vmatprep.subr.bf16.mxu0 %v912
      %944 = vmatpush1.bf16.msra.mxu0 %v911
      %945 = vmatprep.subr.bf16.mxu0 %v914
      %946 = vmatpush1.bf16.msra.mxu0 %v913
      %947 = vmatprep.subr.bf16.mxu0 %v916
      %948 = vmatpush1.bf16.msra.mxu0 %v915
      %949 = vmatprep.subr.bf16.mxu0 %v918
      %950 = vmatpush1.bf16.msra.mxu0 %v917
      %951 = vmatprep.subr.bf16.mxu0 %v920
      %952 = vmatpush1.bf16.msra.mxu0 %v919
      %953 = vmatprep.subr.bf16.mxu0 %v922
      %954 = vmatpush1.bf16.msra.mxu0 %v921
      %955 = vmatprep.subr.bf16.mxu0 %v924
      %956 = vmatpush1.bf16.msra.mxu0 %v923
      %957 = vmatprep.subr.bf16.mxu0 0
      %958 = vmatpush1.bf16.msra.mxu0 0
      %959 = vmatprep.subr.bf16.mxu0 0
      %960 = vmatpush1.bf16.msra.mxu0 0
      %961 = vmatprep.subr.bf16.mxu0 0
      %962 = vmatpush1.bf16.msra.mxu0 0
      %963 = vmatprep.subr.bf16.mxu0 0
      %964 = vmatpush1.bf16.msra.mxu0 0
      %965 = vmatprep.subr.bf16.mxu0 0
      %966 = vmatpush1.bf16.msra.mxu0 0
      %967 = vmatprep.subr.bf16.mxu0 0
      %968 = vmatpush1.bf16.msra.mxu0 0
      %969 = vmatprep.subr.bf16.mxu0 0
      %970 = vmatpush1.bf16.msra.mxu0 0
      %971 = vmatprep.subr.bf16.mxu0 0
      %972 = vmatpush1.bf16.msra.mxu0 0
      %973 = vmatprep.mubr.bf16.mxu0 0
      %974 = vmatmul.mubr.bf16.gmra.mrb[0].mxu0 %v825
      %v975 = vpop.f32.mrb[0].mxu0
      %v976 = vadd.f32 %v854, %v975
      %v977 = vpop.f32.mrb[0].mxu0
      %v978 = vadd.f32 %v858, %v977
      %v979 = vpop.f32.mrb[0].mxu0
      %v980 = vadd.f32 %v854, %v979
      %v981 = vpop.f32.mrb[0].mxu0
      %v982 = vadd.f32 %v858, %v981
      %983 = vmatprep.mubr.bf16.mxu0 0
      %984 = vmatmul.mubr.bf16.gmra.mrb[0].mxu0 %v826
      %v985 = vpop.f32.mrb[0].mxu0
      %v986 = vadd.f32 %v854, %v985
      %v987 = vpop.f32.mrb[0].mxu0
      %v988 = vadd.f32 %v858, %v987
      %v989 = vpop.f32.mrb[0].mxu0
      %v990 = vadd.f32 %v854, %v989
      %v991 = vpop.f32.mrb[0].mxu0
      %v992 = vadd.f32 %v858, %v991
      %993 = vmatprep.mubr.bf16.mxu0 0
      %994 = vmatmul.mubr.bf16.gmra.mrb[0].mxu0 %v827
      %v995 = vpop.f32.mrb[0].mxu0
      %v996 = vadd.f32 %v854, %v995
      %v997 = vpop.f32.mrb[0].mxu0
      %v998 = vadd.f32 %v858, %v997
      %v999 = vpop.f32.mrb[0].mxu0
      %v1000 = vadd.f32 %v854, %v999
      %v1001 = vpop.f32.mrb[0].mxu0
      %v1002 = vadd.f32 %v858, %v1001
      %1003 = vmatprep.mubr.bf16.mxu0 0
      %1004 = vmatmul.mubr.bf16.gmra.mrb[0].mxu0 %v828
      %v1005 = vpop.f32.mrb[0].mxu0
      %v1006 = vadd.f32 %v854, %v1005
      %v1007 = vpop.f32.mrb[0].mxu0
      %v1008 = vadd.f32 %v858, %v1007
      %v1009 = vpop.f32.mrb[0].mxu0
      %v1010 = vadd.f32 %v854, %v1009
      %v1011 = vpop.f32.mrb[0].mxu0
      %v1012 = vadd.f32 %v858, %v1011
      %1013 = vmatprep.mubr.bf16.mxu0 0
      %1014 = vmatmul.mubr.bf16.gmra.mrb[0].mxu0 %v829
      %v1015 = vpop.f32.mrb[0].mxu0
      %v1016 = vadd.f32 %v854, %v1015
      %v1017 = vpop.f32.mrb[0].mxu0
      %v1018 = vadd.f32 %v858, %v1017
      %v1019 = vpop.f32.mrb[0].mxu0
      %v1020 = vadd.f32 %v854, %v1019
      %v1021 = vpop.f32.mrb[0].mxu0
      %v1022 = vadd.f32 %v858, %v1021
      %1023 = vmatprep.mubr.bf16.mxu0 0
      %1024 = vmatmul.mubr.bf16.gmra.mrb[0].mxu0 %v830
      %v1025 = vpop.f32.mrb[0].mxu0
      %v1026 = vadd.f32 %v854, %v1025
      %v1027 = vpop.f32.mrb[0].mxu0
      %v1028 = vadd.f32 %v858, %v1027
      %v1029 = vpop.f32.mrb[0].mxu0
      %v1030 = vadd.f32 %v854, %v1029
      %v1031 = vpop.f32.mrb[0].mxu0
      %v1032 = vadd.f32 %v858, %v1031
      %1033 = vmatprep.mubr.bf16.mxu0 0
      %1034 = vmatmul.mubr.bf16.gmra.mrb[0].mxu0 %v831
      %v1035 = vpop.f32.mrb[0].mxu0
      %v1036 = vadd.f32 %v854, %v1035
      %v1037 = vpop.f32.mrb[0].mxu0
      %v1038 = vadd.f32 %v858, %v1037
      %v1039 = vpop.f32.mrb[0].mxu0
      %v1040 = vadd.f32 %v854, %v1039
      %v1041 = vpop.f32.mrb[0].mxu0
      %v1042 = vadd.f32 %v858, %v1041
      %1043 = vmatprep.mubr.bf16.mxu0 0
      %1044 = vmatmul.mubr.bf16.gmra.mrb[0].mxu0 %v832
      %v1045 = vpop.f32.mrb[0].mxu0
      %v1046 = vadd.f32 %v854, %v1045
      %v1047 = vpop.f32.mrb[0].mxu0
      %v1048 = vadd.f32 %v858, %v1047
      %v1049 = vpop.f32.mrb[0].mxu0
      %v1050 = vadd.f32 %v854, %v1049
      %v1051 = vpop.f32.mrb[0].mxu0
      %v1052 = vadd.f32 %v858, %v1051
      %1053 = vdwg.mxu0
      %v1054 = vmax.f32 %v976, 0.0
      %v1055 = vmax.f32 %v978, 0.0
      %v1056 = vmax.f32 %v980, 0.0
      %v1057 = vmax.f32 %v982, 0.0
      %v1058 = vmax.f32 %v986, 0.0
      %v1059 = vmax.f32 %v988, 0.0
      %v1060 = vmax.f32 %v990, 0.0
      %v1061 = vmax.f32 %v992, 0.0
      %v1062 = vmax.f32 %v996, 0.0
      %v1063 = vmax.f32 %v998, 0.0
      %v1064 = vmax.f32 %v1000, 0.0
      %v1065 = vmax.f32 %v1002, 0.0
      %v1066 = vmax.f32 %v1006, 0.0
      %v1067 = vmax.f32 %v1008, 0.0
      %v1068 = vmax.f32 %v1010, 0.0
      %v1069 = vmax.f32 %v1012, 0.0
      %v1070 = vmax.f32 %v1016, 0.0
      %v1071 = vmax.f32 %v1018, 0.0
      %v1072 = vmax.f32 %v1020, 0.0
      %v1073 = vmax.f32 %v1022, 0.0
      %v1074 = vmax.f32 %v1026, 0.0
      %v1075 = vmax.f32 %v1028, 0.0
      %v1076 = vmax.f32 %v1030, 0.0
      %v1077 = vmax.f32 %v1032, 0.0
      %v1078 = vmax.f32 %v1036, 0.0
      %v1079 = vmax.f32 %v1038, 0.0
      %v1080 = vmax.f32 %v1040, 0.0
      %v1081 = vmax.f32 %v1042, 0.0
      %v1082 = vmax.f32 %v1046, 0.0
      %v1083 = vmax.f32 %v1048, 0.0
      %v1084 = vmax.f32 %v1050, 0.0
      %v1085 = vmax.f32 %v1052, 0.0
      %v1086 = vpack.c.bf16 %v1056, %v1054
      %v1087 = vpack.c.bf16 %v1057, %v1055
      %v1088 = vpack.c.bf16 %v1060, %v1058
      %v1089 = vpack.c.bf16 %v1061, %v1059
      %v1090 = vpack.c.bf16 %v1064, %v1062
      %v1091 = vpack.c.bf16 %v1065, %v1063
      %v1092 = vpack.c.bf16 %v1068, %v1066
      %v1093 = vpack.c.bf16 %v1069, %v1067
      %v1094 = vpack.c.bf16 %v1072, %v1070
      %v1095 = vpack.c.bf16 %v1073, %v1071
      %v1096 = vpack.c.bf16 %v1076, %v1074
      %v1097 = vpack.c.bf16 %v1077, %v1075
      %v1098 = vpack.c.bf16 %v1080, %v1078
      %v1099 = vpack.c.bf16 %v1081, %v1079
      %v1100 = vpack.c.bf16 %v1084, %v1082
      %v1101 = vpack.c.bf16 %v1085, %v1083
      %v1102 = vld [vmem:[%s7] sm:$0xf]
      %v1103 = vld [vmem:[%s7 + $0x4] sm:$0xf]
      %v1104 = vld [vmem:[%s7 + $0x8] sm:$0xf]
      %v1105 = vld [vmem:[%s7 + $0xc] sm:$0xf]
      %v1106 = vld [vmem:[%s7 + $0x10] sm:$0xf]
      %v1107 = vld [vmem:[%s7 + $0x14] sm:$0xf]
      %v1108 = vld [vmem:[%s7 + $0x18] sm:$0xf]
      %v1109 = vld [vmem:[%s7 + $0x1c] sm:$0xf]
      %v1110 = vld [vmem:[%s7 + $0x20] sm:$0xf]
      %v1111 = vld [vmem:[%s7 + $0x24] sm:$0xf]
      %v1112 = vld [vmem:[%s7 + $0x28] sm:$0xf]
      %v1113 = vld [vmem:[%s7 + $0x2c] sm:$0xf]
      %v1114 = vld [vmem:[%s7 + $0x30] sm:$0xf]
      %v1115 = vld [vmem:[%s7 + $0x34] sm:$0xf]
      %v1116 = vld [vmem:[%s7 + $0x38] sm:$0xf]
      %v1117 = vld [vmem:[%s7 + $0x3c] sm:$0xf]
      %v1118 = vld [vmem:[%s7 + $0x40] sm:$0xf]
      %v1119 = vld [vmem:[%s7 + $0x44] sm:$0xf]
      %v1120 = vld [vmem:[%s7 + $0x48] sm:$0xf]
      %v1121 = vld [vmem:[%s7 + $0x4c] sm:$0xf]
      %v1122 = vld [vmem:[%s7 + $0x50] sm:$0xf]
      %v1123 = vld [vmem:[%s7 + $0x54] sm:$0xf]
      %v1124 = vld [vmem:[%s7 + $0x58] sm:$0xf]
      %v1125 = vld [vmem:[%s7 + $0x5c] sm:$0xf]
      %v1126 = vld [vmem:[%s7 + $0x60] sm:$0xf]
      %v1127 = vld [vmem:[%s7 + $0x64] sm:$0xf]
      %v1128 = vld [vmem:[%s7 + $0x68] sm:$0xf]
      %v1129 = vld [vmem:[%s7 + $0x6c] sm:$0xf]
      %v1130 = vld [vmem:[%s7 + $0x70] sm:$0xf]
      %v1131 = vld [vmem:[%s7 + $0x74] sm:$0xf]
      %v1132 = vld [vmem:[%s7 + $0x78] sm:$0xf]
      %v1133 = vld [vmem:[%s7 + $0x7c] sm:$0xf]
      %v1134 = vld [vmem:[%s8] sm:$0x1]
      %v1136 = vlaneseq
      %v1137 = vshrl.u32 %v1136, 7
      %v1138 = vsub.s32 0, %v1137
      %v1139 = vrot.slane %v1134, %v1138
      %v1173 = vunpack.c.l.b16 %v1102
      %v1174 = vunpack.c.l.b16 %v1103
      %v1175 = vunpack.c.l.b16 %v1104
      %v1176 = vunpack.c.l.b16 %v1105
      %v1177 = vunpack.c.l.b16 %v1106
      %v1178 = vunpack.c.l.b16 %v1107
      %v1179 = vunpack.c.l.b16 %v1108
      %v1180 = vunpack.c.l.b16 %v1109
      %v1181 = vunpack.c.l.b16 %v1110
      %v1182 = vunpack.c.l.b16 %v1111
      %v1183 = vunpack.c.l.b16 %v1112
      %v1184 = vunpack.c.l.b16 %v1113
      %v1185 = vunpack.c.l.b16 %v1114
      %v1186 = vunpack.c.l.b16 %v1115
      %v1187 = vunpack.c.l.b16 %v1116
      %v1188 = vunpack.c.l.b16 %v1117
      %v1189 = vunpack.c.l.b16 %v1118
      %v1190 = vunpack.c.l.b16 %v1119
      %v1191 = vunpack.c.l.b16 %v1120
      %v1192 = vunpack.c.l.b16 %v1121
      %v1193 = vunpack.c.l.b16 %v1122
      %v1194 = vunpack.c.l.b16 %v1123
      %v1195 = vunpack.c.l.b16 %v1124
      %v1196 = vunpack.c.l.b16 %v1125
      %v1197 = vunpack.c.l.b16 %v1126
      %v1198 = vunpack.c.l.b16 %v1127
      %v1199 = vunpack.c.l.b16 %v1128
      %v1200 = vunpack.c.l.b16 %v1129
      %v1201 = vunpack.c.l.b16 %v1130
      %v1202 = vunpack.c.l.b16 %v1131
      %v1203 = vunpack.c.l.b16 %v1132
      %v1204 = vunpack.c.l.b16 %v1133
      %v1205 = vpack.c.b16 %v1174, %v1173
      %v1206 = vpack.c.b16 %v1176, %v1175
      %v1207 = vpack.c.b16 %v1178, %v1177
      %v1208 = vpack.c.b16 %v1180, %v1179
      %v1209 = vpack.c.b16 %v1182, %v1181
      %v1210 = vpack.c.b16 %v1184, %v1183
      %v1211 = vpack.c.b16 %v1186, %v1185
      %v1212 = vpack.c.b16 %v1188, %v1187
      %v1213 = vpack.c.b16 %v1190, %v1189
      %v1214 = vpack.c.b16 %v1192, %v1191
      %v1215 = vpack.c.b16 %v1194, %v1193
      %v1216 = vpack.c.b16 %v1196, %v1195
      %v1217 = vpack.c.b16 %v1198, %v1197
      %v1218 = vpack.c.b16 %v1200, %v1199
      %v1219 = vpack.c.b16 %v1202, %v1201
      %v1220 = vpack.c.b16 %v1204, %v1203
      %1237 = vmatprep.subr.bf16.mxu0 0
      %1238 = vmatpush1.bf16.msra.mxu0 %v1205
      %1239 = vmatprep.subr.bf16.mxu0 0
      %1240 = vmatpush1.bf16.msra.mxu0 %v1206
      %1241 = vmatprep.subr.bf16.mxu0 0
      %1242 = vmatpush1.bf16.msra.mxu0 %v1207
      %1243 = vmatprep.subr.bf16.mxu0 0
      %1244 = vmatpush1.bf16.msra.mxu0 %v1208
      %1245 = vmatprep.subr.bf16.mxu0 0
      %1246 = vmatpush1.bf16.msra.mxu0 %v1209
      %1247 = vmatprep.subr.bf16.mxu0 0
      %1248 = vmatpush1.bf16.msra.mxu0 %v1210
      %1249 = vmatprep.subr.bf16.mxu0 0
      %1250 = vmatpush1.bf16.msra.mxu0 %v1211
      %1251 = vmatprep.subr.bf16.mxu0 0
      %1252 = vmatpush1.bf16.msra.mxu0 %v1212
      %1253 = vmatprep.subr.bf16.mxu0 0
      %1254 = vmatpush1.bf16.msra.mxu0 %v1213
      %1255 = vmatprep.subr.bf16.mxu0 0
      %1256 = vmatpush1.bf16.msra.mxu0 %v1214
      %1257 = vmatprep.subr.bf16.mxu0 0
      %1258 = vmatpush1.bf16.msra.mxu0 %v1215
      %1259 = vmatprep.subr.bf16.mxu0 0
      %1260 = vmatpush1.bf16.msra.mxu0 %v1216
      %1261 = vmatprep.subr.bf16.mxu0 0
      %1262 = vmatpush1.bf16.msra.mxu0 %v1217
      %1263 = vmatprep.subr.bf16.mxu0 0
      %1264 = vmatpush1.bf16.msra.mxu0 %v1218
      %1265 = vmatprep.subr.bf16.mxu0 0
      %1266 = vmatpush1.bf16.msra.mxu0 %v1219
      %1267 = vmatprep.subr.bf16.mxu0 0
      %1268 = vmatpush1.bf16.msra.mxu0 %v1220
      %1269 = vmatprep.mubr.bf16.mxu0 %v1087
      %1270 = vmatmul.mubr.bf16.gmra.mrb[0].mxu0 %v1086
      %v1271 = vpop.f32.mrb[0].mxu0
      %v1272 = vadd.f32 %v1139, %v1271
      %v1273 = vpop.f32.mrb[0].mxu0
      %v1274 = vpop.f32.mrb[0].mxu0
      %v1275 = vadd.f32 %v1139, %v1274
      %v1276 = vpop.f32.mrb[0].mxu0
      %1277 = vmatprep.mubr.bf16.mxu0 %v1089
      %1278 = vmatmul.mubr.bf16.gmra.mrb[0].mxu0 %v1088
      %v1279 = vpop.f32.mrb[0].mxu0
      %v1280 = vadd.f32 %v1139, %v1279
      %v1281 = vpop.f32.mrb[0].mxu0
      %v1282 = vpop.f32.mrb[0].mxu0
      %v1283 = vadd.f32 %v1139, %v1282
      %v1284 = vpop.f32.mrb[0].mxu0
      %1285 = vmatprep.mubr.bf16.mxu0 %v1091
      %1286 = vmatmul.mubr.bf16.gmra.mrb[0].mxu0 %v1090
      %v1287 = vpop.f32.mrb[0].mxu0
      %v1288 = vadd.f32 %v1139, %v1287
      %v1289 = vpop.f32.mrb[0].mxu0
      %v1290 = vpop.f32.mrb[0].mxu0
      %v1291 = vadd.f32 %v1139, %v1290
      %v1292 = vpop.f32.mrb[0].mxu0
      %1293 = vmatprep.mubr.bf16.mxu0 %v1093
      %1294 = vmatmul.mubr.bf16.gmra.mrb[0].mxu0 %v1092
      %v1295 = vpop.f32.mrb[0].mxu0
      %v1296 = vadd.f32 %v1139, %v1295
      %v1297 = vpop.f32.mrb[0].mxu0
      %v1298 = vpop.f32.mrb[0].mxu0
      %v1299 = vadd.f32 %v1139, %v1298
      %v1300 = vpop.f32.mrb[0].mxu0
      %1301 = vmatprep.mubr.bf16.mxu0 %v1095
      %1302 = vmatmul.mubr.bf16.gmra.mrb[0].mxu0 %v1094
      %v1303 = vpop.f32.mrb[0].mxu0
      %v1304 = vadd.f32 %v1139, %v1303
      %v1305 = vpop.f32.mrb[0].mxu0
      %v1306 = vpop.f32.mrb[0].mxu0
      %v1307 = vadd.f32 %v1139, %v1306
      %v1308 = vpop.f32.mrb[0].mxu0
      %1309 = vmatprep.mubr.bf16.mxu0 %v1097
      %1310 = vmatmul.mubr.bf16.gmra.mrb[0].mxu0 %v1096
      %v1311 = vpop.f32.mrb[0].mxu0
      %v1312 = vadd.f32 %v1139, %v1311
      %v1313 = vpop.f32.mrb[0].mxu0
      %v1314 = vpop.f32.mrb[0].mxu0
      %v1315 = vadd.f32 %v1139, %v1314
      %v1316 = vpop.f32.mrb[0].mxu0
      %1317 = vmatprep.mubr.bf16.mxu0 %v1099
      %1318 = vmatmul.mubr.bf16.gmra.mrb[0].mxu0 %v1098
      %v1319 = vpop.f32.mrb[0].mxu0
      %v1320 = vadd.f32 %v1139, %v1319
      %v1321 = vpop.f32.mrb[0].mxu0
      %v1322 = vpop.f32.mrb[0].mxu0
      %v1323 = vadd.f32 %v1139, %v1322
      %v1324 = vpop.f32.mrb[0].mxu0
      %1325 = vmatprep.mubr.bf16.mxu0 %v1101
      %1326 = vmatmul.mubr.bf16.gmra.mrb[0].mxu0 %v1100
      %v1327 = vpop.f32.mrb[0].mxu0
      %v1328 = vadd.f32 %v1139, %v1327
      %v1329 = vpop.f32.mrb[0].mxu0
      %v1330 = vpop.f32.mrb[0].mxu0
      %v1331 = vadd.f32 %v1139, %v1330
      %v1332 = vpop.f32.mrb[0].mxu0
      %1333 = vdwg.mxu0
      %v1334 = vmax.f32 %v1272, 0.0
      %v1335 = vmax.f32 %v1275, 0.0
      %v1336 = vmax.f32 %v1280, 0.0
      %v1337 = vmax.f32 %v1283, 0.0
      %v1338 = vmax.f32 %v1288, 0.0
      %v1339 = vmax.f32 %v1291, 0.0
      %v1340 = vmax.f32 %v1296, 0.0
      %v1341 = vmax.f32 %v1299, 0.0
      %v1342 = vmax.f32 %v1304, 0.0
      %v1343 = vmax.f32 %v1307, 0.0
      %v1344 = vmax.f32 %v1312, 0.0
      %v1345 = vmax.f32 %v1315, 0.0
      %v1346 = vmax.f32 %v1320, 0.0
      %v1347 = vmax.f32 %v1323, 0.0
      %v1348 = vmax.f32 %v1328, 0.0
      %v1349 = vmax.f32 %v1331, 0.0
      %v1350 = vpack.c.bf16 %v1335, %v1334
      %v1351 = vpack.c.bf16 %v1337, %v1336
      %v1352 = vpack.c.bf16 %v1339, %v1338
      %v1353 = vpack.c.bf16 %v1341, %v1340
      %v1354 = vpack.c.bf16 %v1343, %v1342
      %v1355 = vpack.c.bf16 %v1345, %v1344
      %v1356 = vpack.c.bf16 %v1347, %v1346
      %v1357 = vpack.c.bf16 %v1349, %v1348
      %v1358 = vld [vmem:[%s9] sm:$0xf]
      %v1359 = vld [vmem:[%s9 + $0x4] sm:$0xf]
      %v1360 = vld [vmem:[%s9 + $0x8] sm:$0xf]
      %v1361 = vld [vmem:[%s9 + $0xc] sm:$0xf]
      %v1362 = vld [vmem:[%s9 + $0x10] sm:$0xf]
      %v1363 = vld [vmem:[%s9 + $0x14] sm:$0xf]
      %v1364 = vld [vmem:[%s9 + $0x18] sm:$0xf]
      %v1365 = vld [vmem:[%s9 + $0x1c] sm:$0xf]
      %v1366 = vld [vmem:[%s9 + $0x20] sm:$0xf]
      %v1367 = vld [vmem:[%s9 + $0x24] sm:$0xf]
      %v1368 = vld [vmem:[%s9 + $0x28] sm:$0xf]
      %v1369 = vld [vmem:[%s9 + $0x2c] sm:$0xf]
      %v1370 = vld [vmem:[%s9 + $0x30] sm:$0xf]
      %v1371 = vld [vmem:[%s9 + $0x34] sm:$0xf]
      %v1372 = vld [vmem:[%s9 + $0x38] sm:$0xf]
      %v1373 = vld [vmem:[%s9 + $0x3c] sm:$0xf]
      %v1374 = vld [vmem:[%s10] sm:$0x1]
      %v1376 = vlaneseq
      %v1377 = vshrl.u32 %v1376, 7
      %v1378 = vsub.s32 0, %v1377
      %v1379 = vrot.slane %v1374, %v1378
      %v1397 = vunpack.c.l.b16 %v1358
      %v1398 = vunpack.c.l.b16 %v1359
      %v1399 = vunpack.c.l.b16 %v1360
      %v1400 = vunpack.c.l.b16 %v1361
      %v1401 = vunpack.c.l.b16 %v1362
      %v1402 = vunpack.c.l.b16 %v1363
      %v1403 = vunpack.c.l.b16 %v1364
      %v1404 = vunpack.c.l.b16 %v1365
      %v1405 = vunpack.c.l.b16 %v1366
      %v1406 = vunpack.c.l.b16 %v1367
      %v1407 = vunpack.c.l.b16 %v1368
      %v1408 = vunpack.c.l.b16 %v1369
      %v1409 = vunpack.c.l.b16 %v1370
      %v1410 = vunpack.c.l.b16 %v1371
      %v1411 = vunpack.c.l.b16 %v1372
      %v1412 = vunpack.c.l.b16 %v1373
      %v1413 = vpack.c.b16 %v1398, %v1397
      %v1414 = vpack.c.b16 %v1400, %v1399
      %v1415 = vpack.c.b16 %v1402, %v1401
      %v1416 = vpack.c.b16 %v1404, %v1403
      %v1417 = vpack.c.b16 %v1406, %v1405
      %v1418 = vpack.c.b16 %v1408, %v1407
      %v1419 = vpack.c.b16 %v1410, %v1409
      %v1420 = vpack.c.b16 %v1412, %v1411
      %1429 = vmatprep.subr.bf16.mxu0 0
      %1430 = vmatpush1.bf16.msra.mxu0 %v1413
      %1431 = vmatprep.subr.bf16.mxu0 0
      %1432 = vmatpush1.bf16.msra.mxu0 %v1414
      %1433 = vmatprep.subr.bf16.mxu0 0
      %1434 = vmatpush1.bf16.msra.mxu0 %v1415
      %1435 = vmatprep.subr.bf16.mxu0 0
      %1436 = vmatpush1.bf16.msra.mxu0 %v1416
      %1437 = vmatprep.subr.bf16.mxu0 0
      %1438 = vmatpush1.bf16.msra.mxu0 %v1417
      %1439 = vmatprep.subr.bf16.mxu0 0
      %1440 = vmatpush1.bf16.msra.mxu0 %v1418
      %1441 = vmatprep.subr.bf16.mxu0 0
      %1442 = vmatpush1.bf16.msra.mxu0 %v1419
      %1443 = vmatprep.subr.bf16.mxu0 0
      %1444 = vmatpush1.bf16.msra.mxu0 %v1420
      %1445 = vmatprep.subr.bf16.mxu0 0
      %1446 = vmatpush1.bf16.msra.mxu0 0
      %1447 = vmatprep.subr.bf16.mxu0 0
      %1448 = vmatpush1.bf16.msra.mxu0 0
      %1449 = vmatprep.subr.bf16.mxu0 0
      %1450 = vmatpush1.bf16.msra.mxu0 0
      %1451 = vmatprep.subr.bf16.mxu0 0
      %1452 = vmatpush1.bf16.msra.mxu0 0
      %1453 = vmatprep.subr.bf16.mxu0 0
      %1454 = vmatpush1.bf16.msra.mxu0 0
      %1455 = vmatprep.subr.bf16.mxu0 0
      %1456 = vmatpush1.bf16.msra.mxu0 0
      %1457 = vmatprep.subr.bf16.mxu0 0
      %1458 = vmatpush1.bf16.msra.mxu0 0
      %1459 = vmatprep.subr.bf16.mxu0 0
      %1460 = vmatpush1.bf16.msra.mxu0 0
      %1461 = vmatprep.mubr.bf16.mxu0 0
      %1462 = vmatmul.mubr.bf16.gmra.mrb[0].mxu0 %v1350
      %v1463 = vpop.f32.mrb[0].mxu0
      %v1464 = vadd.f32 %v1379, %v1463
      %v1465 = vpop.f32.mrb[0].mxu0
      %v1466 = vpop.f32.mrb[0].mxu0
      %v1467 = vadd.f32 %v1379, %v1466
      %v1468 = vpop.f32.mrb[0].mxu0
      %1469 = vmatprep.mubr.bf16.mxu0 0
      %1470 = vmatmul.mubr.bf16.gmra.mrb[0].mxu0 %v1351
      %v1471 = vpop.f32.mrb[0].mxu0
      %v1472 = vadd.f32 %v1379, %v1471
      %v1473 = vpop.f32.mrb[0].mxu0
      %v1474 = vpop.f32.mrb[0].mxu0
      %v1475 = vadd.f32 %v1379, %v1474
      %v1476 = vpop.f32.mrb[0].mxu0
      %1477 = vmatprep.mubr.bf16.mxu0 0
      %1478 = vmatmul.mubr.bf16.gmra.mrb[0].mxu0 %v1352
      %v1479 = vpop.f32.mrb[0].mxu0
      %v1480 = vadd.f32 %v1379, %v1479
      %v1481 = vpop.f32.mrb[0].mxu0
      %v1482 = vpop.f32.mrb[0].mxu0
      %v1483 = vadd.f32 %v1379, %v1482
      %v1484 = vpop.f32.mrb[0].mxu0
      %1485 = vmatprep.mubr.bf16.mxu0 0
      %1486 = vmatmul.mubr.bf16.gmra.mrb[0].mxu0 %v1353
      %v1487 = vpop.f32.mrb[0].mxu0
      %v1488 = vadd.f32 %v1379, %v1487
      %v1489 = vpop.f32.mrb[0].mxu0
      %v1490 = vpop.f32.mrb[0].mxu0
      %v1491 = vadd.f32 %v1379, %v1490
      %v1492 = vpop.f32.mrb[0].mxu0
      %1493 = vmatprep.mubr.bf16.mxu0 0
      %1494 = vmatmul.mubr.bf16.gmra.mrb[0].mxu0 %v1354
      %v1495 = vpop.f32.mrb[0].mxu0
      %v1496 = vadd.f32 %v1379, %v1495
      %v1497 = vpop.f32.mrb[0].mxu0
      %v1498 = vpop.f32.mrb[0].mxu0
      %v1499 = vadd.f32 %v1379, %v1498
      %v1500 = vpop.f32.mrb[0].mxu0
      %1501 = vmatprep.mubr.bf16.mxu0 0
      %1502 = vmatmul.mubr.bf16.gmra.mrb[0].mxu0 %v1355
      %v1503 = vpop.f32.mrb[0].mxu0
      %v1504 = vadd.f32 %v1379, %v1503
      %v1505 = vpop.f32.mrb[0].mxu0
      %v1506 = vpop.f32.mrb[0].mxu0
      %v1507 = vadd.f32 %v1379, %v1506
      %v1508 = vpop.f32.mrb[0].mxu0
      %1509 = vmatprep.mubr.bf16.mxu0 0
      %1510 = vmatmul.mubr.bf16.gmra.mrb[0].mxu0 %v1356
      %v1511 = vpop.f32.mrb[0].mxu0
      %v1512 = vadd.f32 %v1379, %v1511
      %v1513 = vpop.f32.mrb[0].mxu0
      %v1514 = vpop.f32.mrb[0].mxu0
      %v1515 = vadd.f32 %v1379, %v1514
      %v1516 = vpop.f32.mrb[0].mxu0
      %1517 = vmatprep.mubr.bf16.mxu0 0
      %1518 = vmatmul.mubr.bf16.gmra.mrb[0].mxu0 %v1357
      %v1519 = vpop.f32.mrb[0].mxu0
      %v1520 = vadd.f32 %v1379, %v1519
      %v1521 = vpop.f32.mrb[0].mxu0
      %v1522 = vpop.f32.mrb[0].mxu0
      %v1523 = vadd.f32 %v1379, %v1522
      %v1524 = vpop.f32.mrb[0].mxu0
      %1525 = vdwg.mxu0
      %v1526 = vmax.f32 %v1464, 0.0
      %v1527 = vmax.f32 %v1467, 0.0
      %v1528 = vmax.f32 %v1472, 0.0
      %v1529 = vmax.f32 %v1475, 0.0
      %v1530 = vmax.f32 %v1480, 0.0
      %v1531 = vmax.f32 %v1483, 0.0
      %v1532 = vmax.f32 %v1488, 0.0
      %v1533 = vmax.f32 %v1491, 0.0
      %v1534 = vmax.f32 %v1496, 0.0
      %v1535 = vmax.f32 %v1499, 0.0
      %v1536 = vmax.f32 %v1504, 0.0
      %v1537 = vmax.f32 %v1507, 0.0
      %v1538 = vmax.f32 %v1512, 0.0
      %v1539 = vmax.f32 %v1515, 0.0
      %v1540 = vmax.f32 %v1520, 0.0
      %v1541 = vmax.f32 %v1523, 0.0
      %v1542 = vunpack.c.l.bf16 %v625
      %v1543 = vunpack.c.h.bf16 %v625
      %v1544 = vunpack.c.l.bf16 %v626
      %v1545 = vunpack.c.h.bf16 %v626
      %v1546 = vunpack.c.l.bf16 %v627
      %v1547 = vunpack.c.h.bf16 %v627
      %v1548 = vunpack.c.l.bf16 %v628
      %v1549 = vunpack.c.h.bf16 %v628
      %v1550 = vunpack.c.l.bf16 %v629
      %v1551 = vunpack.c.h.bf16 %v629
      %v1552 = vunpack.c.l.bf16 %v630
      %v1553 = vunpack.c.h.bf16 %v630
      %v1554 = vunpack.c.l.bf16 %v631
      %v1555 = vunpack.c.h.bf16 %v631
      %v1556 = vunpack.c.l.bf16 %v632
      %v1557 = vunpack.c.h.bf16 %v632
      %v1558 = vadd.f32 %v1526, %v1542
      %v1559 = vadd.f32 %v1527, %v1543
      %v1560 = vadd.f32 %v1528, %v1544
      %v1561 = vadd.f32 %v1529, %v1545
      %v1562 = vadd.f32 %v1530, %v1546
      %v1563 = vadd.f32 %v1531, %v1547
      %v1564 = vadd.f32 %v1532, %v1548
      %v1565 = vadd.f32 %v1533, %v1549
      %v1566 = vadd.f32 %v1534, %v1550
      %v1567 = vadd.f32 %v1535, %v1551
      %v1568 = vadd.f32 %v1536, %v1552
      %v1569 = vadd.f32 %v1537, %v1553
      %v1570 = vadd.f32 %v1538, %v1554
      %v1571 = vadd.f32 %v1539, %v1555
      %v1572 = vadd.f32 %v1540, %v1556
      %v1573 = vadd.f32 %v1541, %v1557
      %v1574 = vpack.c.bf16 %v1559, %v1558
      %v1575 = vpack.c.bf16 %v1561, %v1560
      %v1576 = vpack.c.bf16 %v1563, %v1562
      %v1577 = vpack.c.bf16 %v1565, %v1564
      %v1578 = vpack.c.bf16 %v1567, %v1566
      %v1579 = vpack.c.bf16 %v1569, %v1568
      %v1580 = vpack.c.bf16 %v1571, %v1570
      %v1581 = vpack.c.bf16 %v1573, %v1572
      %v1582 = vld [vmem:[%s11] sm:$0xf]
      %v1583 = vld [vmem:[%s11 + $0x4] sm:$0xf]
      %v1584 = vld [vmem:[%s11 + $0x8] sm:$0xf]
      %v1585 = vld [vmem:[%s11 + $0xc] sm:$0xf]
      %v1586 = vld [vmem:[%s11 + $0x10] sm:$0xf]
      %v1587 = vld [vmem:[%s11 + $0x14] sm:$0xf]
      %v1588 = vld [vmem:[%s11 + $0x18] sm:$0xf]
      %v1589 = vld [vmem:[%s11 + $0x1c] sm:$0xf]
      %v1590 = vld [vmem:[%s11 + $0x20] sm:$0xf]
      %v1591 = vld [vmem:[%s11 + $0x24] sm:$0xf]
      %v1592 = vld [vmem:[%s11 + $0x28] sm:$0xf]
      %v1593 = vld [vmem:[%s11 + $0x2c] sm:$0xf]
      %v1594 = vld [vmem:[%s11 + $0x30] sm:$0xf]
      %v1595 = vld [vmem:[%s11 + $0x34] sm:$0xf]
      %v1596 = vld [vmem:[%s11 + $0x38] sm:$0xf]
      %v1597 = vld [vmem:[%s11 + $0x3c] sm:$0xf]
      %v1598 = vld [vmem:[%s12] sm:$0x1]
      %v1600 = vlaneseq
      %v1601 = vshrl.u32 %v1600, 7
      %v1602 = vsub.s32 0, %v1601
      %v1603 = vrot.slane %v1598, %v1602
      %v1621 = vunpack.c.l.b16 %v1582
      %v1622 = vunpack.c.l.b16 %v1583
      %v1623 = vunpack.c.l.b16 %v1584
      %v1624 = vunpack.c.l.b16 %v1585
      %v1625 = vunpack.c.l.b16 %v1586
      %v1626 = vunpack.c.l.b16 %v1587
      %v1627 = vunpack.c.l.b16 %v1588
      %v1628 = vunpack.c.l.b16 %v1589
      %v1629 = vunpack.c.l.b16 %v1590
      %v1630 = vunpack.c.l.b16 %v1591
      %v1631 = vunpack.c.l.b16 %v1592
      %v1632 = vunpack.c.l.b16 %v1593
      %v1633 = vunpack.c.l.b16 %v1594
      %v1634 = vunpack.c.l.b16 %v1595
      %v1635 = vunpack.c.l.b16 %v1596
      %v1636 = vunpack.c.l.b16 %v1597
      %v1637 = vpack.c.b16 %v1622, %v1621
      %v1638 = vpack.c.b16 %v1624, %v1623
      %v1639 = vpack.c.b16 %v1626, %v1625
      %v1640 = vpack.c.b16 %v1628, %v1627
      %v1641 = vpack.c.b16 %v1630, %v1629
      %v1642 = vpack.c.b16 %v1632, %v1631
      %v1643 = vpack.c.b16 %v1634, %v1633
      %v1644 = vpack.c.b16 %v1636, %v1635
      %1653 = vmatprep.subr.bf16.mxu0 0
      %1654 = vmatpush1.bf16.msra.mxu0 %v1637
      %1655 = vmatprep.subr.bf16.mxu0 0
      %1656 = vmatpush1.bf16.msra.mxu0 %v1638
      %1657 = vmatprep.subr.bf16.mxu0 0
      %1658 = vmatpush1.bf16.msra.mxu0 %v1639
      %1659 = vmatprep.subr.bf16.mxu0 0
      %1660 = vmatpush1.bf16.msra.mxu0 %v1640
      %1661 = vmatprep.subr.bf16.mxu0 0
      %1662 = vmatpush1.bf16.msra.mxu0 %v1641
      %1663 = vmatprep.subr.bf16.mxu0 0
      %1664 = vmatpush1.bf16.msra.mxu0 %v1642
      %1665 = vmatprep.subr.bf16.mxu0 0
      %1666 = vmatpush1.bf16.msra.mxu0 %v1643
      %1667 = vmatprep.subr.bf16.mxu0 0
      %1668 = vmatpush1.bf16.msra.mxu0 %v1644
      %1669 = vmatprep.subr.bf16.mxu0 0
      %1670 = vmatpush1.bf16.msra.mxu0 0
      %1671 = vmatprep.subr.bf16.mxu0 0
      %1672 = vmatpush1.bf16.msra.mxu0 0
      %1673 = vmatprep.subr.bf16.mxu0 0
      %1674 = vmatpush1.bf16.msra.mxu0 0
      %1675 = vmatprep.subr.bf16.mxu0 0
      %1676 = vmatpush1.bf16.msra.mxu0 0
      %1677 = vmatprep.subr.bf16.mxu0 0
      %1678 = vmatpush1.bf16.msra.mxu0 0
      %1679 = vmatprep.subr.bf16.mxu0 0
      %1680 = vmatpush1.bf16.msra.mxu0 0
      %1681 = vmatprep.subr.bf16.mxu0 0
      %1682 = vmatpush1.bf16.msra.mxu0 0
      %1683 = vmatprep.subr.bf16.mxu0 0
      %1684 = vmatpush1.bf16.msra.mxu0 0
      %1685 = vmatprep.mubr.bf16.mxu0 0
      %1686 = vmatmul.mubr.bf16.gmra.mrb[0].mxu0 %v1574
      %v1687 = vpop.f32.mrb[0].mxu0
      %v1688 = vadd.f32 %v1603, %v1687
      %v1689 = vpop.f32.mrb[0].mxu0
      %v1690 = vpop.f32.mrb[0].mxu0
      %v1691 = vadd.f32 %v1603, %v1690
      %v1692 = vpop.f32.mrb[0].mxu0
      %1693 = vmatprep.mubr.bf16.mxu0 0
      %1694 = vmatmul.mubr.bf16.gmra.mrb[0].mxu0 %v1575
      %v1695 = vpop.f32.mrb[0].mxu0
      %v1696 = vadd.f32 %v1603, %v1695
      %v1697 = vpop.f32.mrb[0].mxu0
      %v1698 = vpop.f32.mrb[0].mxu0
      %v1699 = vadd.f32 %v1603, %v1698
      %v1700 = vpop.f32.mrb[0].mxu0
      %1701 = vmatprep.mubr.bf16.mxu0 0
      %1702 = vmatmul.mubr.bf16.gmra.mrb[0].mxu0 %v1576
      %v1703 = vpop.f32.mrb[0].mxu0
      %v1704 = vadd.f32 %v1603, %v1703
      %v1705 = vpop.f32.mrb[0].mxu0
      %v1706 = vpop.f32.mrb[0].mxu0
      %v1707 = vadd.f32 %v1603, %v1706
      %v1708 = vpop.f32.mrb[0].mxu0
      %1709 = vmatprep.mubr.bf16.mxu0 0
      %1710 = vmatmul.mubr.bf16.gmra.mrb[0].mxu0 %v1577
      %v1711 = vpop.f32.mrb[0].mxu0
      %v1712 = vadd.f32 %v1603, %v1711
      %v1713 = vpop.f32.mrb[0].mxu0
      %v1714 = vpop.f32.mrb[0].mxu0
      %v1715 = vadd.f32 %v1603, %v1714
      %v1716 = vpop.f32.mrb[0].mxu0
      %1717 = vmatprep.mubr.bf16.mxu0 0
      %1718 = vmatmul.mubr.bf16.gmra.mrb[0].mxu0 %v1578
      %v1719 = vpop.f32.mrb[0].mxu0
      %v1720 = vadd.f32 %v1603, %v1719
      %v1721 = vpop.f32.mrb[0].mxu0
      %v1722 = vpop.f32.mrb[0].mxu0
      %v1723 = vadd.f32 %v1603, %v1722
      %v1724 = vpop.f32.mrb[0].mxu0
      %1725 = vmatprep.mubr.bf16.mxu0 0
      %1726 = vmatmul.mubr.bf16.gmra.mrb[0].mxu0 %v1579
      %v1727 = vpop.f32.mrb[0].mxu0
      %v1728 = vadd.f32 %v1603, %v1727
      %v1729 = vpop.f32.mrb[0].mxu0
      %v1730 = vpop.f32.mrb[0].mxu0
      %v1731 = vadd.f32 %v1603, %v1730
      %v1732 = vpop.f32.mrb[0].mxu0
      %1733 = vmatprep.mubr.bf16.mxu0 0
      %1734 = vmatmul.mubr.bf16.gmra.mrb[0].mxu0 %v1580
      %v1735 = vpop.f32.mrb[0].mxu0
      %v1736 = vadd.f32 %v1603, %v1735
      %v1737 = vpop.f32.mrb[0].mxu0
      %v1738 = vpop.f32.mrb[0].mxu0
      %v1739 = vadd.f32 %v1603, %v1738
      %v1740 = vpop.f32.mrb[0].mxu0
      %1741 = vmatprep.mubr.bf16.mxu0 0
      %1742 = vmatmul.mubr.bf16.gmra.mrb[0].mxu0 %v1581
      %v1743 = vpop.f32.mrb[0].mxu0
      %v1744 = vadd.f32 %v1603, %v1743
      %v1745 = vpop.f32.mrb[0].mxu0
      %v1746 = vpop.f32.mrb[0].mxu0
      %v1747 = vadd.f32 %v1603, %v1746
      %v1748 = vpop.f32.mrb[0].mxu0
      %1749 = vdwg.mxu0
      %v1750 = vpack.c.bf16 %v1691, %v1688
      %v1751 = vpack.c.bf16 %v1699, %v1696
      %v1752 = vpack.c.bf16 %v1707, %v1704
      %v1753 = vpack.c.bf16 %v1715, %v1712
      %v1754 = vpack.c.bf16 %v1723, %v1720
      %v1755 = vpack.c.bf16 %v1731, %v1728
      %v1756 = vpack.c.bf16 %v1739, %v1736
      %v1757 = vpack.c.bf16 %v1747, %v1744
      %v1766 = vunpack.c.l.b16 %v1750
      %v1767 = vunpack.c.h.b16 %v1750
      %v1768 = vunpack.c.l.b16 %v1751
      %v1769 = vunpack.c.h.b16 %v1751
      %v1770 = vunpack.c.l.b16 %v1752
      %v1771 = vunpack.c.h.b16 %v1752
      %v1772 = vunpack.c.l.b16 %v1753
      %v1773 = vunpack.c.h.b16 %v1753
      %v1774 = vunpack.c.l.b16 %v1754
      %v1775 = vunpack.c.h.b16 %v1754
      %v1776 = vunpack.c.l.b16 %v1755
      %v1777 = vunpack.c.h.b16 %v1755
      %v1778 = vunpack.c.l.b16 %v1756
      %v1779 = vunpack.c.h.b16 %v1756
      %v1780 = vunpack.c.l.b16 %v1757
      %v1781 = vunpack.c.h.b16 %v1757
      %v1782 = vpack.c.b16 %v1766, %v1766
      %v1783 = vpack.c.b16 %v1767, %v1767
      %v1784 = vpack.c.b16 %v1768, %v1768
      %v1785 = vpack.c.b16 %v1769, %v1769
      %v1786 = vpack.c.b16 %v1770, %v1770
      %v1787 = vpack.c.b16 %v1771, %v1771
      %v1788 = vpack.c.b16 %v1772, %v1772
      %v1789 = vpack.c.b16 %v1773, %v1773
      %v1790 = vpack.c.b16 %v1774, %v1774
      %v1791 = vpack.c.b16 %v1775, %v1775
      %v1792 = vpack.c.b16 %v1776, %v1776
      %v1793 = vpack.c.b16 %v1777, %v1777
      %v1794 = vpack.c.b16 %v1778, %v1778
      %v1795 = vpack.c.b16 %v1779, %v1779
      %v1796 = vpack.c.b16 %v1780, %v1780
      %v1797 = vpack.c.b16 %v1781, %v1781
      %1814 = vst [vmem:[%s442] sm:$0xf] %v1782
      %1815 = vst [vmem:[%s442 + $0x4] sm:$0xf] %v1783
      %1816 = vst [vmem:[%s442 + $0x8] sm:$0xf] %v1784
      %1817 = vst [vmem:[%s442 + $0xc] sm:$0xf] %v1785
      %1818 = vst [vmem:[%s442 + $0x10] sm:$0xf] %v1786
      %1819 = vst [vmem:[%s442 + $0x14] sm:$0xf] %v1787
      %1820 = vst [vmem:[%s442 + $0x18] sm:$0xf] %v1788
      %1821 = vst [vmem:[%s442 + $0x1c] sm:$0xf] %v1789
      %1822 = vst [vmem:[%s442 + $0x20] sm:$0xf] %v1790
      %1823 = vst [vmem:[%s442 + $0x24] sm:$0xf] %v1791
      %1824 = vst [vmem:[%s442 + $0x28] sm:$0xf] %v1792
      %1825 = vst [vmem:[%s442 + $0x2c] sm:$0xf] %v1793
      %1826 = vst [vmem:[%s442 + $0x30] sm:$0xf] %v1794
      %1827 = vst [vmem:[%s442 + $0x34] sm:$0xf] %v1795
      %1828 = vst [vmem:[%s442 + $0x38] sm:$0xf] %v1796
      %1829 = vst [vmem:[%s442 + $0x3c] sm:$0xf] %v1797
      %s1830 = smul.u32 16, %s24
      %p1831 = scmp.lt.s32.totalorder %s1830, 31
      %s1832 = scalar_select %p1831, %s1830, 31
      %s1833 = smul.addr %s1832, 4
      %s1834 = scalar_lea.vmem %s13, %s1833
      // Predicated region
      $region73: #{qnetwork_fc_forward.1} parent=71 // pred_check
        %p1835 = pneg %p320
      $region74: #{qnetwork_fc_forward.1} parent=71 // pred_check_branch
        %1837 = sbr.rel (%p1835) target = $region76
      $region75: #{qnetwork_fc_forward.1} parent=71 // pred_region
        %s1838 = smul.u32 16, %s24
      $region76: #{qnetwork_fc_forward.1} parent=71 // pred_fallthru
        _
    $region72: #{qnetwork_fc_forward.1} parent=5 // pred_fallthru
      _
    %p1839 = scmp.le.s32.totalorder 2, %s19
    // Predicated region
    $region77: #{qnetwork_fc_forward.1} parent=5 // pred_check
      %p1840 = pneg %p1839
    $region78: #{qnetwork_fc_forward.1} parent=5 // pred_check_branch
      %1842 = sbr.rel (%p1840) target = $region80
    $region79: #{qnetwork_fc_forward.1} parent=5 // pred_region
      %s1843 = ssub.s32 %s19, 2
      // Predicated region
      $region81: #{qnetwork_fc_forward.1} parent=79 // pred_check
        %p1844 = pneg %p326
      $region82: #{qnetwork_fc_forward.1} parent=79 // pred_check_branch
        %1846 = sbr.rel (%p1844) target = $region84
      $region83: #{qnetwork_fc_forward.1} parent=79 // pred_region
        %s1847 = smul.u32 16, %s25
        %p1848 = scmp.lt.s32.totalorder %s1847, 31
        %s1849 = scalar_select %p1848, %s1847, 31
        %s1850 = smul.addr %s1849, 4
        %s1851 = scalar_lea.vmem %s13, %s1850
      $region84: #{qnetwork_fc_forward.1} parent=79 // pred_fallthru
        _
    $region80: #{qnetwork_fc_forward.1} parent=5 // pred_fallthru
      _
  $region6: #{qnetwork_fc_forward.1} parent=0 // loop_footer
    %s23 = sadd.s32 1, %s19
  $region7: #{qnetwork_fc_forward.1} parent=0 // loop_footer_branch
    %18 = sbr.rel target = $region3
  $region8: #{qnetwork_fc_forward.1} parent=0 // loop_exit
    _

</llo_original>
